<compile_context>
chip_gen: v7x
topology: tpu7x:2x2x1
jax: 0.10.0
libtpu: 0.0.40
codegen_flags: <defaults>
</compile_context>

<pallas_src>
import functools
import math

import jax
import jax.numpy as jnp
from jax.experimental import pallas as pl
from jax.experimental.pallas import tpu as pltpu

ALPHA = 0.2        # leaky-relu negative slope (SpGAT ctor arg)
DROPOUT = 0.6      # TODO(synk): dropout is identity in eval mode (training=False)

# Operand dtype of the e @ h aggregation matmul.  jnp.bfloat16 doubles the MXU
# rate on v5e/v6e/v7x (accumulation stays f32) at a ~1e-3 numerical shift;
# kept f32 here to stay bit-close to the PyTorch reference.  The exp/score
# path is kept f32 as well so the kernel is v5e-safe (no bf16 VPU/EUP there).
AGG_DTYPE = jnp.float32


def _elu(x):
    return jnp.where(x > 0, x, jnp.exp(x) - 1.0)


def _round_up(x, m):
    return (x + m - 1) // m * m


def _gat_attention_kernel(s1_ref, s2t_ref, h_ref, adj_ref, out_ref,
                          acc_ref, rs_ref, *, nheads, alpha):
    """One (row_tile, col_tile) step of masked GAT attention for all heads.

    s1_ref : (TR, nheads) f32        a1 . h_i for the row tile
    s2t_ref: (nheads, TC) f32        a2 . h_j for the col tile (pre-transposed)
    h_ref  : (nheads, TC, nhid)      per-head features of the col tile
    adj_ref: (TR, TC) int8           0/1 adjacency mask tile
    out_ref: (nheads, TR, nhid) f32  tanh(elu(sum_j e_ij h_j / sum_j e_ij))
    acc_ref: (nheads, TR, nhid) f32  VMEM accumulator for e @ h
    rs_ref : (nheads, TR, 1) f32     VMEM accumulator for row sums of e
    """
    c = pl.program_id(1)

    @pl.when(c == 0)
    def _init():
        acc_ref[...] = jnp.zeros_like(acc_ref)
        rs_ref[...] = jnp.zeros_like(rs_ref)

    # adj was binarised to 0/1 by the wrapper, so the cast IS the mask.
    maskf = adj_ref[...].astype(jnp.float32)                   # (TR, TC)
    s1 = s1_ref[...]                                           # (TR, nheads)
    s2 = s2t_ref[...]                                          # (nheads, TC)

    # Small static loop over heads: only (TR, TC)-sized temporaries are live
    # and the adj tile is loaded once and shared by every head.
    for k in range(nheads):
        # scores_ij = s1_i + s2_j via cheap lane / sublane broadcasts.
        scores = s1[:, k:k + 1] + s2[k:k + 1, :]               # (TR, TC)
        # e = exp(-leakyrelu(scores)) * mask, leakyrelu(s) = max(s, alpha*s).
        e = jnp.exp(-jnp.maximum(scores, alpha * scores)) * maskf
        rs_ref[k] = rs_ref[k] + jnp.sum(e, axis=-1, keepdims=True)
        acc_ref[k] = acc_ref[k] + jnp.dot(
            e.astype(h_ref.dtype), h_ref[k],
            preferred_element_type=jnp.float32)

    @pl.when(c == pl.num_programs(1) - 1)
    def _finalize():
        for k in range(nheads):
            # reciprocal-multiply instead of a divide (set approx=True for the
            # EUP fast path; exact kept for tight parity with the reference).
            inv = pl.reciprocal(rs_ref[k], approx=False)       # (TR, 1)
            hp = acc_ref[k] * inv                              # (TR, nhid)
            out_ref[k] = jnp.tanh(_elu(hp))


def _gat_attention(h3, s1, s2t, adj_i8, *, alpha, tr, tc):
    """Tiled masked attention: returns (nheads, Np, nhid) = tanh(elu(softmax-less GAT))."""
    nheads, np_, nhid = h3.shape
    grid = (np_ // tr, np_ // tc)
    kernel = functools.partial(_gat_attention_kernel, nheads=nheads, alpha=alpha)
    return pl.pallas_call(
        kernel,
        out_shape=jax.ShapeDtypeStruct((nheads, np_, nhid), jnp.float32),
        grid_spec=pltpu.PrefetchScalarGridSpec(
            num_scalar_prefetch=0,
            grid=grid,
            in_specs=[
                pl.BlockSpec((tr, nheads), lambda r, c: (r, 0)),        # s1
                pl.BlockSpec((nheads, tc), lambda r, c: (0, c)),        # s2^T
                pl.BlockSpec((nheads, tc, nhid), lambda r, c: (0, c, 0)),  # h cols
                pl.BlockSpec((tr, tc), lambda r, c: (r, c)),            # adj tile
            ],
            out_specs=pl.BlockSpec((nheads, tr, nhid), lambda r, c: (0, r, 0)),
            scratch_shapes=[
                pltpu.VMEM((nheads, tr, nhid), jnp.float32),   # e @ h accumulator
                pltpu.VMEM((nheads, tr, 1), jnp.float32),      # row-sum accumulator
            ]),
        compiler_params=pltpu.CompilerParams(
            dimension_semantics=("parallel", "arbitrary"),     # rows split over TCs
            vmem_limit_bytes=48 * 1024 * 1024),
        cost_estimate=pl.CostEstimate(
            flops=int(2 * nheads * np_ * np_ * nhid + 6 * nheads * np_ * np_),
            transcendentals=int(nheads * np_ * np_),
            bytes_accessed=int(np_ * np_                       # int8 adj (read once)
                               + 2 * nheads * np_ * nhid * 4
                               + 4 * nheads * np_ * 4)),
    )(s1, s2t, h3, adj_i8)


def _spgat_forward(x, adj, W_heads, a_heads, W_out, a_out, *,
                   alpha=ALPHA, tr=128, tc=128):
    """SpGAT forward (eval mode). x:(N,nfeat) f32, adj:(N,N) dense edge mask."""
    n, nfeat = x.shape
    nheads, _, nhid = W_heads.shape
    nclass = W_out.shape[1]
    np_ = _round_up(n, math.lcm(tr, tc))

    # ---- pad node axis; binarise adj to int8 (4x less HBM/VMEM than f32) ----
    xp = jnp.zeros((np_, nfeat), jnp.float32).at[:n, :].set(x.astype(jnp.float32))
    adj_i8 = jnp.zeros((np_, np_), jnp.int8).at[:n, :n].set(
        (adj != 0).astype(jnp.int8))
    # Self-loop on padded rows only, so their row-sums stay nonzero (padded
    # rows are sliced off; real rows are untouched -> PyTorch semantics kept).
    idx = jnp.arange(np_)
    diag = jnp.maximum(adj_i8[idx, idx], (idx >= n).astype(jnp.int8))
    adj_i8 = adj_i8.at[idx, idx].set(diag)

    # ---- layer 1: nheads SpGraphAttentionLayers (concat=True) + tanh --------
    # One packed, lane-dense projection matmul instead of nheads skinny ones.
    w_packed = W_heads.transpose(1, 0, 2).reshape(nfeat, nheads * nhid)
    h1 = (xp @ w_packed).reshape(np_, nheads, nhid)            # (Np, nheads, nhid)
    a1 = a_heads[:, :nhid]
    a2 = a_heads[:, nhid:]
    s1 = jnp.einsum('nkd,kd->nk', h1, a1)                      # (Np, nheads)
    s2t = jnp.einsum('nkd,kd->kn', h1, a2)                     # (nheads, Np)
    h3 = h1.transpose(1, 0, 2).astype(AGG_DTYPE)               # (nheads, Np, nhid)
    o1 = _gat_attention(h3, s1, s2t, adj_i8, alpha=alpha, tr=tr, tc=tc)
    # elu+tanh are elementwise, so per-head tanh(elu(.)) (done in-kernel) ==
    # tanh(cat(elu(.))); the transpose/reshape is pure layout plumbing.
    z = o1.transpose(1, 0, 2).reshape(np_, nheads * nhid)

    # ---- layer 2: out_att (concat=False) then F.elu then tanh ---------------
    h2 = z @ W_out                                             # (Np, nclass)
    s1o = h2 @ a_out[:, :nclass].T                             # (Np, 1)
    s2o = (h2 @ a_out[:, nclass:].T).T                         # (1, Np)
    o2 = _gat_attention(h2[None].astype(AGG_DTYPE), s1o, s2o, adj_i8,
                        alpha=alpha, tr=tr, tc=tc)
    return o2[0, :n, :]                                        # (N, nclass)


spgat_forward = jax.jit(_spgat_forward, static_argnames=("alpha", "tr", "tc"))


def spgat_reference(x, adj, W_heads, a_heads, W_out, a_out, alpha=ALPHA):
    """Pure-JAX reference with the exact PyTorch math (for correctness check)."""
    nheads, _, nhid = W_heads.shape
    nclass = W_out.shape[1]
    mask = adj != 0.0

    def layer(z, W, a1, a2, apply_elu):
        h = z @ W
        s1 = jnp.sum(h * a1, -1, keepdims=True)
        s2 = jnp.sum(h * a2, -1, keepdims=True)
        scores = s1 + s2.T
        lrelu = jnp.where(scores > 0, scores, alpha * scores)
        e = jnp.where(mask, jnp.exp(-lrelu), 0.0)
        hp = (e @ h) / jnp.sum(e, -1, keepdims=True)
        return _elu(hp) if apply_elu else hp

    heads = [layer(x, W_heads[k], a_heads[k:k + 1, :nhid],
                   a_heads[k:k + 1, nhid:], True) for k in range(nheads)]
    z = jnp.tanh(jnp.concatenate(heads, axis=1))
    out = layer(z, W_out, a_out[:, :nclass], a_out[:, nclass:], False)
    return jnp.tanh(_elu(out))


if __name__ == "__main__":
    # Small shapes consistent with SpGAT(nfeat, nhid, nclass, dropout, alpha, nheads)
    N, nfeat, nhid, nclass, nheads = 16, 8, 8, 4, 2

    key = jax.random.PRNGKey(0)
    kx, kadj, kw, ka, kwo, kao = jax.random.split(key, 6)

    x = jax.random.normal(kx, (N, nfeat), jnp.float32)
    adj = jnp.maximum(
        (jax.random.uniform(kadj, (N, N)) < 0.35).astype(jnp.float32),
        jnp.eye(N, dtype=jnp.float32))   # self-loops keep rowsums > 0

    def xavier(k, shape, fan_in, fan_out):
        lim = jnp.sqrt(6.0 / (fan_in + fan_out))
        return jax.random.uniform(k, shape, jnp.float32, -lim, lim)

    W_heads = xavier(kw, (nheads, nfeat, nhid), nfeat, nhid)       # per-head W
    a_heads = xavier(ka, (nheads, 2 * nhid), 2 * nhid, 1)          # per-head a
    W_out = xavier(kwo, (nhid * nheads, nclass), nhid * nheads, nclass)
    a_out = xavier(kao, (1, 2 * nclass), 2 * nclass, 1)

    out = spgat_forward(x, adj, W_heads, a_heads, W_out, a_out)
    out = jax.block_until_ready(out)

    ref = spgat_reference(x, adj, W_heads, a_heads, W_out, a_out)
    assert out.shape == (N, nclass)
    assert jnp.allclose(out, ref, atol=1e-4, rtol=1e-4), "mismatch vs JAX reference"

    print("KERNEL_OK")
</pallas_src>

<mosaic_0001>
module attributes {stable_mosaic.version = 11 : i64} {
  func.func @_gat_attention_kernel(%arg0: i32, %arg1: i32, %arg2: memref<128x2xf32, #tpu.memory_space<vmem>>, %arg3: memref<2x128xf32, #tpu.memory_space<vmem>>, %arg4: memref<2x128x8xf32, #tpu.memory_space<vmem>>, %arg5: memref<128x128xi8, #tpu.memory_space<vmem>>, %arg6: memref<2x128x8xf32, #tpu.memory_space<vmem>>, %arg7: memref<2x128x8xf32, #tpu.memory_space<vmem>>, %arg8: memref<2x128x1xf32, #tpu.memory_space<vmem>>) attributes {dimension_semantics = [#tpu.dimension_semantics<parallel>, #tpu.dimension_semantics<arbitrary>], iteration_bounds = array<i64: 1, 1>, scalar_prefetch = 0 : i64, scratch_operands = 2 : i64, tpu.core_type = #tpu.core_type<tc>, window_params = [{transform_indices = @transform_0, window_bounds = array<i64: 128, 2>}, {transform_indices = @transform_1, window_bounds = array<i64: 2, 128>}, {transform_indices = @transform_2, window_bounds = array<i64: 2, 128, 8>}, {transform_indices = @transform_3, window_bounds = array<i64: 128, 128>}, {transform_indices = @transform_4, window_bounds = array<i64: 2, 128, 8>}]} {
    %c0_i32 = arith.constant 0 : i32
    %0 = arith.cmpi eq, %arg1, %c0_i32 : i32
    %1 = arith.extui %0 : i1 to i32
    %c0_i32_0 = arith.constant 0 : i32
    %2 = arith.cmpi ne, %1, %c0_i32_0 : i32
    scf.if %2 {
      %cst_44 = arith.constant 0.000000e+00 : f32
      %68 = vector.broadcast %cst_44 : f32 to vector<2x128x8xf32>
      %c0_45 = arith.constant 0 : index
      %c0_46 = arith.constant 0 : index
      %c0_47 = arith.constant 0 : index
      %69 = vector.load %arg7[%c0_45, %c0_46, %c0_47] : memref<2x128x8xf32, #tpu.memory_space<vmem>>, vector<2x128x8xf32>
      tpu.vector_store %arg7[%c0_45, %c0_46, %c0_47], %68 {strides = array<i32>} : memref<2x128x8xf32, #tpu.memory_space<vmem>>, vector<2x128x8xf32>,
      %cst_48 = arith.constant 0.000000e+00 : f32
      %70 = vector.broadcast %cst_48 : f32 to vector<2x128x1xf32>
      %c0_49 = arith.constant 0 : index
      %c0_50 = arith.constant 0 : index
      %c0_51 = arith.constant 0 : index
      %71 = vector.load %arg8[%c0_49, %c0_50, %c0_51] : memref<2x128x1xf32, #tpu.memory_space<vmem>>, vector<2x128x1xf32>
      tpu.vector_store %arg8[%c0_49, %c0_50, %c0_51], %70 {strides = array<i32>} : memref<2x128x1xf32, #tpu.memory_space<vmem>>, vector<2x128x1xf32>,
    } else {
    }
    %c0 = arith.constant 0 : index
    %c0_1 = arith.constant 0 : index
    %3 = vector.load %arg5[%c0, %c0_1] : memref<128x128xi8, #tpu.memory_space<vmem>>, vector<128x128xi8>
    %4 = arith.sitofp %3 : vector<128x128xi8> to vector<128x128xf32>
    %c0_2 = arith.constant 0 : index
    %c0_3 = arith.constant 0 : index
    %5 = vector.load %arg2[%c0_2, %c0_3] : memref<128x2xf32, #tpu.memory_space<vmem>>, vector<128x2xf32>
    %c0_4 = arith.constant 0 : index
    %c0_5 = arith.constant 0 : index
    %6 = vector.load %arg3[%c0_4, %c0_5] : memref<2x128xf32, #tpu.memory_space<vmem>>, vector<2x128xf32>
    %7 = vector.extract_strided_slice %5 {offsets = [0, 0], sizes = [128, 1], strides = [1, 1]} : vector<128x2xf32> to vector<128x1xf32>
    %8 = vector.extract_strided_slice %6 {offsets = [0, 0], sizes = [1, 128], strides = [1, 1]} : vector<2x128xf32> to vector<1x128xf32>
    %9 = vector.broadcast %7 : vector<128x1xf32> to vector<128x128xf32>
    %10 = vector.broadcast %8 : vector<1x128xf32> to vector<128x128xf32>
    %11 = arith.addf %9, %10 : vector<128x128xf32>
    %cst = arith.constant 2.000000e-01 : f32
    %12 = vector.broadcast %cst : f32 to vector<128x128xf32>
    %13 = arith.mulf %12, %11 : vector<128x128xf32>
    %14 = arith.maximumf %11, %13 : vector<128x128xf32>
    %cst_6 = arith.constant 0.000000e+00 : f32
    %15 = vector.broadcast %cst_6 : f32 to vector<128x128xf32>
    %16 = arith.subf %15, %14 : vector<128x128xf32>
    %17 = math.exp %16 : vector<128x128xf32>
    %18 = arith.mulf %17, %4 : vector<128x128xf32>
    %c0_7 = arith.constant 0 : index
    %c0_8 = arith.constant 0 : index
    %c0_9 = arith.constant 0 : index
    %19 = vector.load %arg8[%c0_7, %c0_8, %c0_9] : memref<2x128x1xf32, #tpu.memory_space<vmem>>, vector<1x128x1xf32>
    %20 = vector.shape_cast %19 : vector<1x128x1xf32> to vector<128x1xf32>
    %cst_10 = arith.constant dense<0.000000e+00> : vector<128xf32>
    %21 = vector.multi_reduction <add>, %18, %cst_10 [1] : vector<128x128xf32> to vector<128xf32>
    %22 = vector.shape_cast %21 : vector<128xf32> to vector<128x1xf32>
    %23 = arith.addf %20, %22 : vector<128x1xf32>
    %c0_11 = arith.constant 0 : index
    %c0_12 = arith.constant 0 : index
    %c0_13 = arith.constant 0 : index
    %24 = vector.load %arg8[%c0_11, %c0_12, %c0_13] : memref<2x128x1xf32, #tpu.memory_space<vmem>>, vector<1x128x1xf32>
    %25 = vector.shape_cast %24 : vector<1x128x1xf32> to vector<128x1xf32>
    %26 = vector.shape_cast %23 : vector<128x1xf32> to vector<1x128x1xf32>
    tpu.vector_store %arg8[%c0_11, %c0_12, %c0_13], %26 {strides = array<i32>} : memref<2x128x1xf32, #tpu.memory_space<vmem>>, vector<1x128x1xf32>,
    %c0_14 = arith.constant 0 : index
    %c0_15 = arith.constant 0 : index
    %c0_16 = arith.constant 0 : index
    %27 = vector.load %arg7[%c0_14, %c0_15, %c0_16] : memref<2x128x8xf32, #tpu.memory_space<vmem>>, vector<1x128x8xf32>
    %28 = vector.shape_cast %27 : vector<1x128x8xf32> to vector<128x8xf32>
    %c0_17 = arith.constant 0 : index
    %c0_18 = arith.constant 0 : index
    %c0_19 = arith.constant 0 : index
    %29 = vector.load %arg4[%c0_17, %c0_18, %c0_19] : memref<2x128x8xf32, #tpu.memory_space<vmem>>, vector<1x128x8xf32>
    %30 = vector.shape_cast %29 : vector<1x128x8xf32> to vector<128x8xf32>
    %cst_20 = arith.constant dense<0.000000e+00> : vector<128x8xf32>
    %31 = tpu.matmul %18, %30, %cst_20 {dimension_numbers = #tpu.dot_dimension_numbers<[1], [0], [0], [1], [0, 0, 1, 1], [], []>} : vector<128x128xf32>, vector<128x8xf32>, vector<128x8xf32> -> vector<128x8xf32>
    %32 = arith.addf %28, %31 : vector<128x8xf32>
    %c0_21 = arith.constant 0 : index
    %c0_22 = arith.constant 0 : index
    %c0_23 = arith.constant 0 : index
    %33 = vector.load %arg7[%c0_21, %c0_22, %c0_23] : memref<2x128x8xf32, #tpu.memory_space<vmem>>, vector<1x128x8xf32>
    %34 = vector.shape_cast %33 : vector<1x128x8xf32> to vector<128x8xf32>
    %35 = vector.shape_cast %32 : vector<128x8xf32> to vector<1x128x8xf32>
    tpu.vector_store %arg7[%c0_21, %c0_22, %c0_23], %35 {strides = array<i32>} : memref<2x128x8xf32, #tpu.memory_space<vmem>>, vector<1x128x8xf32>,
    %36 = vector.extract_strided_slice %5 {offsets = [0, 1], sizes = [128, 1], strides = [1, 1]} : vector<128x2xf32> to vector<128x1xf32>
    %37 = vector.extract_strided_slice %6 {offsets = [1, 0], sizes = [1, 128], strides = [1, 1]} : vector<2x128xf32> to vector<1x128xf32>
    %38 = vector.broadcast %36 : vector<128x1xf32> to vector<128x128xf32>
    %39 = vector.broadcast %37 : vector<1x128xf32> to vector<128x128xf32>
    %40 = arith.addf %38, %39 : vector<128x128xf32>
    %cst_24 = arith.constant 2.000000e-01 : f32
    %41 = vector.broadcast %cst_24 : f32 to vector<128x128xf32>
    %42 = arith.mulf %41, %40 : vector<128x128xf32>
    %43 = arith.maximumf %40, %42 : vector<128x128xf32>
    %cst_25 = arith.constant 0.000000e+00 : f32
    %44 = vector.broadcast %cst_25 : f32 to vector<128x128xf32>
    %45 = arith.subf %44, %43 : vector<128x128xf32>
    %46 = math.exp %45 : vector<128x128xf32>
    %47 = arith.mulf %46, %4 : vector<128x128xf32>
    %c1 = arith.constant 1 : index
    %c0_26 = arith.constant 0 : index
    %c0_27 = arith.constant 0 : index
    %48 = vector.load %arg8[%c1, %c0_26, %c0_27] : memref<2x128x1xf32, #tpu.memory_space<vmem>>, vector<1x128x1xf32>
    %49 = vector.shape_cast %48 : vector<1x128x1xf32> to vector<128x1xf32>
    %cst_28 = arith.constant dense<0.000000e+00> : vector<128xf32>
    %50 = vector.multi_reduction <add>, %47, %cst_28 [1] : vector<128x128xf32> to vector<128xf32>
    %51 = vector.shape_cast %50 : vector<128xf32> to vector<128x1xf32>
    %52 = arith.addf %49, %51 : vector<128x1xf32>
    %c1_29 = arith.constant 1 : index
    %c0_30 = arith.constant 0 : index
    %c0_31 = arith.constant 0 : index
    %53 = vector.load %arg8[%c1_29, %c0_30, %c0_31] : memref<2x128x1xf32, #tpu.memory_space<vmem>>, vector<1x128x1xf32>
    %54 = vector.shape_cast %53 : vector<1x128x1xf32> to vector<128x1xf32>
    %55 = vector.shape_cast %52 : vector<128x1xf32> to vector<1x128x1xf32>
    tpu.vector_store %arg8[%c1_29, %c0_30, %c0_31], %55 {strides = array<i32>} : memref<2x128x1xf32, #tpu.memory_space<vmem>>, vector<1x128x1xf32>,
    %c1_32 = arith.constant 1 : index
    %c0_33 = arith.constant 0 : index
    %c0_34 = arith.constant 0 : index
    %56 = vector.load %arg7[%c1_32, %c0_33, %c0_34] : memref<2x128x8xf32, #tpu.memory_space<vmem>>, vector<1x128x8xf32>
    %57 = vector.shape_cast %56 : vector<1x128x8xf32> to vector<128x8xf32>
    %c1_35 = arith.constant 1 : index
    %c0_36 = arith.constant 0 : index
    %c0_37 = arith.constant 0 : index
    %58 = vector.load %arg4[%c1_35, %c0_36, %c0_37] : memref<2x128x8xf32, #tpu.memory_space<vmem>>, vector<1x128x8xf32>
    %59 = vector.shape_cast %58 : vector<1x128x8xf32> to vector<128x8xf32>
    %cst_38 = arith.constant dense<0.000000e+00> : vector<128x8xf32>
    %60 = tpu.matmul %47, %59, %cst_38 {dimension_numbers = #tpu.dot_dimension_numbers<[1], [0], [0], [1], [0, 0, 1, 1], [], []>} : vector<128x128xf32>, vector<128x8xf32>, vector<128x8xf32> -> vector<128x8xf32>
    %61 = arith.addf %57, %60 : vector<128x8xf32>
    %c1_39 = arith.constant 1 : index
    %c0_40 = arith.constant 0 : index
    %c0_41 = arith.constant 0 : index
    %62 = vector.load %arg7[%c1_39, %c0_40, %c0_41] : memref<2x128x8xf32, #tpu.memory_space<vmem>>, vector<1x128x8xf32>
    %63 = vector.shape_cast %62 : vector<1x128x8xf32> to vector<128x8xf32>
    %64 = vector.shape_cast %61 : vector<128x8xf32> to vector<1x128x8xf32>
    tpu.vector_store %arg7[%c1_39, %c0_40, %c0_41], %64 {strides = array<i32>} : memref<2x128x8xf32, #tpu.memory_space<vmem>>, vector<1x128x8xf32>,
    %c0_i32_42 = arith.constant 0 : i32
    %65 = arith.cmpi eq, %arg1, %c0_i32_42 : i32
    %66 = arith.extui %65 : i1 to i32
    %c0_i32_43 = arith.constant 0 : i32
    %67 = arith.cmpi ne, %66, %c0_i32_43 : i32
    scf.if %67 {
      %c0_44 = arith.constant 0 : index
      %c0_45 = arith.constant 0 : index
      %c0_46 = arith.constant 0 : index
      %68 = vector.load %arg8[%c0_44, %c0_45, %c0_46] : memref<2x128x1xf32, #tpu.memory_space<vmem>>, vector<1x128x1xf32>
      %69 = vector.shape_cast %68 : vector<1x128x1xf32> to vector<128x1xf32>
      %70 = tpu.reciprocal %69 : vector<128x1xf32> -> vector<128x1xf32>
      %c0_47 = arith.constant 0 : index
      %c0_48 = arith.constant 0 : index
      %c0_49 = arith.constant 0 : index
      %71 = vector.load %arg7[%c0_47, %c0_48, %c0_49] : memref<2x128x8xf32, #tpu.memory_space<vmem>>, vector<1x128x8xf32>
      %72 = vector.shape_cast %71 : vector<1x128x8xf32> to vector<128x8xf32>
      %73 = vector.broadcast %70 : vector<128x1xf32> to vector<128x8xf32>
      %74 = arith.mulf %72, %73 : vector<128x8xf32>
      %cst_50 = arith.constant 0.000000e+00 : f32
      %75 = vector.broadcast %cst_50 : f32 to vector<128x8xf32>
      %76 = arith.cmpf ogt, %74, %75 : vector<128x8xf32>
      %77 = math.exp %74 : vector<128x8xf32>
      %cst_51 = arith.constant 1.000000e+00 : f32
      %78 = vector.broadcast %cst_51 : f32 to vector<128x8xf32>
      %79 = arith.subf %77, %78 : vector<128x8xf32>
      %80 = arith.select %76, %74, %79 : vector<128x8xi1>, vector<128x8xf32>
      %81 = math.tanh %80 : vector<128x8xf32>
      %c0_52 = arith.constant 0 : index
      %c0_53 = arith.constant 0 : index
      %c0_54 = arith.constant 0 : index
      %82 = vector.load %arg6[%c0_52, %c0_53, %c0_54] : memref<2x128x8xf32, #tpu.memory_space<vmem>>, vector<1x128x8xf32>
      %83 = vector.shape_cast %82 : vector<1x128x8xf32> to vector<128x8xf32>
      %84 = vector.shape_cast %81 : vector<128x8xf32> to vector<1x128x8xf32>
      tpu.vector_store %arg6[%c0_52, %c0_53, %c0_54], %84 {strides = array<i32>} : memref<2x128x8xf32, #tpu.memory_space<vmem>>, vector<1x128x8xf32>,
      %c1_55 = arith.constant 1 : index
      %c0_56 = arith.constant 0 : index
      %c0_57 = arith.constant 0 : index
      %85 = vector.load %arg8[%c1_55, %c0_56, %c0_57] : memref<2x128x1xf32, #tpu.memory_space<vmem>>, vector<1x128x1xf32>
      %86 = vector.shape_cast %85 : vector<1x128x1xf32> to vector<128x1xf32>
      %87 = tpu.reciprocal %86 : vector<128x1xf32> -> vector<128x1xf32>
      %c1_58 = arith.constant 1 : index
      %c0_59 = arith.constant 0 : index
      %c0_60 = arith.constant 0 : index
      %88 = vector.load %arg7[%c1_58, %c0_59, %c0_60] : memref<2x128x8xf32, #tpu.memory_space<vmem>>, vector<1x128x8xf32>
      %89 = vector.shape_cast %88 : vector<1x128x8xf32> to vector<128x8xf32>
      %90 = vector.broadcast %87 : vector<128x1xf32> to vector<128x8xf32>
      %91 = arith.mulf %89, %90 : vector<128x8xf32>
      %cst_61 = arith.constant 0.000000e+00 : f32
      %92 = vector.broadcast %cst_61 : f32 to vector<128x8xf32>
      %93 = arith.cmpf ogt, %91, %92 : vector<128x8xf32>
      %94 = math.exp %91 : vector<128x8xf32>
      %cst_62 = arith.constant 1.000000e+00 : f32
      %95 = vector.broadcast %cst_62 : f32 to vector<128x8xf32>
      %96 = arith.subf %94, %95 : vector<128x8xf32>
      %97 = arith.select %93, %91, %96 : vector<128x8xi1>, vector<128x8xf32>
      %98 = math.tanh %97 : vector<128x8xf32>
      %c1_63 = arith.constant 1 : index
      %c0_64 = arith.constant 0 : index
      %c0_65 = arith.constant 0 : index
      %99 = vector.load %arg6[%c1_63, %c0_64, %c0_65] : memref<2x128x8xf32, #tpu.memory_space<vmem>>, vector<1x128x8xf32>
      %100 = vector.shape_cast %99 : vector<1x128x8xf32> to vector<128x8xf32>
      %101 = vector.shape_cast %98 : vector<128x8xf32> to vector<1x128x8xf32>
      tpu.vector_store %arg6[%c1_63, %c0_64, %c0_65], %101 {strides = array<i32>} : memref<2x128x8xf32, #tpu.memory_space<vmem>>, vector<1x128x8xf32>,
    } else {
    }
    return
  }
  func.func @transform_0(%arg0: i32, %arg1: i32) -> (i32, i32) {
    %c0_i32 = arith.constant 0 : i32
    %c0_i32_0 = arith.constant 0 : i32
    return %arg0, %c0_i32 : i32, i32
  }
  func.func @transform_1(%arg0: i32, %arg1: i32) -> (i32, i32) {
    %c0_i32 = arith.constant 0 : i32
    %c0_i32_0 = arith.constant 0 : i32
    return %c0_i32, %arg1 : i32, i32
  }
  func.func @transform_2(%arg0: i32, %arg1: i32) -> (i32, i32, i32) {
    %c0_i32 = arith.constant 0 : i32
    %c0_i32_0 = arith.constant 0 : i32
    %c0_i32_1 = arith.constant 0 : i32
    return %c0_i32, %arg1, %c0_i32_0 : i32, i32, i32
  }
  func.func @transform_3(%arg0: i32, %arg1: i32) -> (i32, i32) {
    %c0_i32 = arith.constant 0 : i32
    return %arg0, %arg1 : i32, i32
  }
  func.func @transform_4(%arg0: i32, %arg1: i32) -> (i32, i32, i32) {
    %c0_i32 = arith.constant 0 : i32
    %c0_i32_0 = arith.constant 0 : i32
    %c0_i32_1 = arith.constant 0 : i32
    return %c0_i32, %arg0, %c0_i32_0 : i32, i32, i32
  }
}

module attributes {stable_mosaic.version = 11 : i64} {
  func.func @_gat_attention_kernel(%arg0: i32, %arg1: i32, %arg2: memref<128x1xf32, #tpu.memory_space<vmem>>, %arg3: memref<1x128xf32, #tpu.memory_space<vmem>>, %arg4: memref<1x128x4xf32, #tpu.memory_space<vmem>>, %arg5: memref<128x128xi8, #tpu.memory_space<vmem>>, %arg6: memref<1x128x4xf32, #tpu.memory_space<vmem>>, %arg7: memref<1x128x4xf32, #tpu.memory_space<vmem>>, %arg8: memref<1x128x1xf32, #tpu.memory_space<vmem>>) attributes {dimension_semantics = [#tpu.dimension_semantics<parallel>, #tpu.dimension_semantics<arbitrary>], iteration_bounds = array<i64: 1, 1>, scalar_prefetch = 0 : i64, scratch_operands = 2 : i64, tpu.core_type = #tpu.core_type<tc>, window_params = [{transform_indices = @transform_0, window_bounds = array<i64: 128, 1>}, {transform_indices = @transform_1, window_bounds = array<i64: 1, 128>}, {transform_indices = @transform_2, window_bounds = array<i64: 1, 128, 4>}, {transform_indices = @transform_3, window_bounds = array<i64: 128, 128>}, {transform_indices = @transform_4, window_bounds = array<i64: 1, 128, 4>}]} {
    %c0_i32 = arith.constant 0 : i32
    %0 = arith.cmpi eq, %arg1, %c0_i32 : i32
    %1 = arith.extui %0 : i1 to i32
    %c0_i32_0 = arith.constant 0 : i32
    %2 = arith.cmpi ne, %1, %c0_i32_0 : i32
    scf.if %2 {
      %cst_26 = arith.constant 0.000000e+00 : f32
      %37 = vector.broadcast %cst_26 : f32 to vector<1x128x4xf32>
      %c0_27 = arith.constant 0 : index
      %c0_28 = arith.constant 0 : index
      %c0_29 = arith.constant 0 : index
      %38 = vector.load %arg7[%c0_27, %c0_28, %c0_29] : memref<1x128x4xf32, #tpu.memory_space<vmem>>, vector<1x128x4xf32>
      tpu.vector_store %arg7[%c0_27, %c0_28, %c0_29], %37 {strides = array<i32>} : memref<1x128x4xf32, #tpu.memory_space<vmem>>, vector<1x128x4xf32>,
      %cst_30 = arith.constant 0.000000e+00 : f32
      %39 = vector.broadcast %cst_30 : f32 to vector<1x128x1xf32>
      %c0_31 = arith.constant 0 : index
      %c0_32 = arith.constant 0 : index
      %c0_33 = arith.constant 0 : index
      %40 = vector.load %arg8[%c0_31, %c0_32, %c0_33] : memref<1x128x1xf32, #tpu.memory_space<vmem>>, vector<1x128x1xf32>
      tpu.vector_store %arg8[%c0_31, %c0_32, %c0_33], %39 {strides = array<i32>} : memref<1x128x1xf32, #tpu.memory_space<vmem>>, vector<1x128x1xf32>,
    } else {
    }
    %c0 = arith.constant 0 : index
    %c0_1 = arith.constant 0 : index
    %3 = vector.load %arg5[%c0, %c0_1] : memref<128x128xi8, #tpu.memory_space<vmem>>, vector<128x128xi8>
    %4 = arith.sitofp %3 : vector<128x128xi8> to vector<128x128xf32>
    %c0_2 = arith.constant 0 : index
    %c0_3 = arith.constant 0 : index
    %5 = vector.load %arg2[%c0_2, %c0_3] : memref<128x1xf32, #tpu.memory_space<vmem>>, vector<128x1xf32>
    %c0_4 = arith.constant 0 : index
    %c0_5 = arith.constant 0 : index
    %6 = vector.load %arg3[%c0_4, %c0_5] : memref<1x128xf32, #tpu.memory_space<vmem>>, vector<1x128xf32>
    %7 = vector.broadcast %5 : vector<128x1xf32> to vector<128x128xf32>
    %8 = vector.broadcast %6 : vector<1x128xf32> to vector<128x128xf32>
    %9 = arith.addf %7, %8 : vector<128x128xf32>
    %cst = arith.constant 2.000000e-01 : f32
    %10 = vector.broadcast %cst : f32 to vector<128x128xf32>
    %11 = arith.mulf %10, %9 : vector<128x128xf32>
    %12 = arith.maximumf %9, %11 : vector<128x128xf32>
    %cst_6 = arith.constant 0.000000e+00 : f32
    %13 = vector.broadcast %cst_6 : f32 to vector<128x128xf32>
    %14 = arith.subf %13, %12 : vector<128x128xf32>
    %15 = math.exp %14 : vector<128x128xf32>
    %16 = arith.mulf %15, %4 : vector<128x128xf32>
    %c0_7 = arith.constant 0 : index
    %c0_8 = arith.constant 0 : index
    %c0_9 = arith.constant 0 : index
    %17 = vector.load %arg8[%c0_7, %c0_8, %c0_9] : memref<1x128x1xf32, #tpu.memory_space<vmem>>, vector<1x128x1xf32>
    %18 = vector.shape_cast %17 : vector<1x128x1xf32> to vector<128x1xf32>
    %cst_10 = arith.constant dense<0.000000e+00> : vector<128xf32>
    %19 = vector.multi_reduction <add>, %16, %cst_10 [1] : vector<128x128xf32> to vector<128xf32>
    %20 = vector.shape_cast %19 : vector<128xf32> to vector<128x1xf32>
    %21 = arith.addf %18, %20 : vector<128x1xf32>
    %c0_11 = arith.constant 0 : index
    %c0_12 = arith.constant 0 : index
    %c0_13 = arith.constant 0 : index
    %22 = vector.load %arg8[%c0_11, %c0_12, %c0_13] : memref<1x128x1xf32, #tpu.memory_space<vmem>>, vector<1x128x1xf32>
    %23 = vector.shape_cast %22 : vector<1x128x1xf32> to vector<128x1xf32>
    %24 = vector.shape_cast %21 : vector<128x1xf32> to vector<1x128x1xf32>
    tpu.vector_store %arg8[%c0_11, %c0_12, %c0_13], %24 {strides = array<i32>} : memref<1x128x1xf32, #tpu.memory_space<vmem>>, vector<1x128x1xf32>,
    %c0_14 = arith.constant 0 : index
    %c0_15 = arith.constant 0 : index
    %c0_16 = arith.constant 0 : index
    %25 = vector.load %arg7[%c0_14, %c0_15, %c0_16] : memref<1x128x4xf32, #tpu.memory_space<vmem>>, vector<1x128x4xf32>
    %26 = vector.shape_cast %25 : vector<1x128x4xf32> to vector<128x4xf32>
    %c0_17 = arith.constant 0 : index
    %c0_18 = arith.constant 0 : index
    %c0_19 = arith.constant 0 : index
    %27 = vector.load %arg4[%c0_17, %c0_18, %c0_19] : memref<1x128x4xf32, #tpu.memory_space<vmem>>, vector<1x128x4xf32>
    %28 = vector.shape_cast %27 : vector<1x128x4xf32> to vector<128x4xf32>
    %cst_20 = arith.constant dense<0.000000e+00> : vector<128x4xf32>
    %29 = tpu.matmul %16, %28, %cst_20 {dimension_numbers = #tpu.dot_dimension_numbers<[1], [0], [0], [1], [0, 0, 1, 1], [], []>} : vector<128x128xf32>, vector<128x4xf32>, vector<128x4xf32> -> vector<128x4xf32>
    %30 = arith.addf %26, %29 : vector<128x4xf32>
    %c0_21 = arith.constant 0 : index
    %c0_22 = arith.constant 0 : index
    %c0_23 = arith.constant 0 : index
    %31 = vector.load %arg7[%c0_21, %c0_22, %c0_23] : memref<1x128x4xf32, #tpu.memory_space<vmem>>, vector<1x128x4xf32>
    %32 = vector.shape_cast %31 : vector<1x128x4xf32> to vector<128x4xf32>
    %33 = vector.shape_cast %30 : vector<128x4xf32> to vector<1x128x4xf32>
    tpu.vector_store %arg7[%c0_21, %c0_22, %c0_23], %33 {strides = array<i32>} : memref<1x128x4xf32, #tpu.memory_space<vmem>>, vector<1x128x4xf32>,
    %c0_i32_24 = arith.constant 0 : i32
    %34 = arith.cmpi eq, %arg1, %c0_i32_24 : i32
    %35 = arith.extui %34 : i1 to i32
    %c0_i32_25 = arith.constant 0 : i32
    %36 = arith.cmpi ne, %35, %c0_i32_25 : i32
    scf.if %36 {
      %c0_26 = arith.constant 0 : index
      %c0_27 = arith.constant 0 : index
      %c0_28 = arith.constant 0 : index
      %37 = vector.load %arg8[%c0_26, %c0_27, %c0_28] : memref<1x128x1xf32, #tpu.memory_space<vmem>>, vector<1x128x1xf32>
      %38 = vector.shape_cast %37 : vector<1x128x1xf32> to vector<128x1xf32>
      %39 = tpu.reciprocal %38 : vector<128x1xf32> -> vector<128x1xf32>
      %c0_29 = arith.constant 0 : index
      %c0_30 = arith.constant 0 : index
      %c0_31 = arith.constant 0 : index
      %40 = vector.load %arg7[%c0_29, %c0_30, %c0_31] : memref<1x128x4xf32, #tpu.memory_space<vmem>>, vector<1x128x4xf32>
      %41 = vector.shape_cast %40 : vector<1x128x4xf32> to vector<128x4xf32>
      %42 = vector.broadcast %39 : vector<128x1xf32> to vector<128x4xf32>
      %43 = arith.mulf %41, %42 : vector<128x4xf32>
      %cst_32 = arith.constant 0.000000e+00 : f32
      %44 = vector.broadcast %cst_32 : f32 to vector<128x4xf32>
      %45 = arith.cmpf ogt, %43, %44 : vector<128x4xf32>
      %46 = math.exp %43 : vector<128x4xf32>
      %cst_33 = arith.constant 1.000000e+00 : f32
      %47 = vector.broadcast %cst_33 : f32 to vector<128x4xf32>
      %48 = arith.subf %46, %47 : vector<128x4xf32>
      %49 = arith.select %45, %43, %48 : vector<128x4xi1>, vector<128x4xf32>
      %50 = math.tanh %49 : vector<128x4xf32>
      %c0_34 = arith.constant 0 : index
      %c0_35 = arith.constant 0 : index
      %c0_36 = arith.constant 0 : index
      %51 = vector.load %arg6[%c0_34, %c0_35, %c0_36] : memref<1x128x4xf32, #tpu.memory_space<vmem>>, vector<1x128x4xf32>
      %52 = vector.shape_cast %51 : vector<1x128x4xf32> to vector<128x4xf32>
      %53 = vector.shape_cast %50 : vector<128x4xf32> to vector<1x128x4xf32>
      tpu.vector_store %arg6[%c0_34, %c0_35, %c0_36], %53 {strides = array<i32>} : memref<1x128x4xf32, #tpu.memory_space<vmem>>, vector<1x128x4xf32>,
    } else {
    }
    return
  }
  func.func @transform_0(%arg0: i32, %arg1: i32) -> (i32, i32) {
    %c0_i32 = arith.constant 0 : i32
    %c0_i32_0 = arith.constant 0 : i32
    return %arg0, %c0_i32 : i32, i32
  }
  func.func @transform_1(%arg0: i32, %arg1: i32) -> (i32, i32) {
    %c0_i32 = arith.constant 0 : i32
    %c0_i32_0 = arith.constant 0 : i32
    return %c0_i32, %arg1 : i32, i32
  }
  func.func @transform_2(%arg0: i32, %arg1: i32) -> (i32, i32, i32) {
    %c0_i32 = arith.constant 0 : i32
    %c0_i32_0 = arith.constant 0 : i32
    %c0_i32_1 = arith.constant 0 : i32
    return %c0_i32, %arg1, %c0_i32_0 : i32, i32, i32
  }
  func.func @transform_3(%arg0: i32, %arg1: i32) -> (i32, i32) {
    %c0_i32 = arith.constant 0 : i32
    return %arg0, %arg1 : i32, i32
  }
  func.func @transform_4(%arg0: i32, %arg1: i32) -> (i32, i32, i32) {
    %c0_i32 = arith.constant 0 : i32
    %c0_i32_0 = arith.constant 0 : i32
    %c0_i32_1 = arith.constant 0 : i32
    return %c0_i32, %arg0, %c0_i32_0 : i32, i32, i32
  }
}

</mosaic_0001>

<llo_original>
// kernel: _spgat_forward.2
$region0: #{_spgat_forward.2}
  #allocation0 [shape = 'u32[]', space=smem, size = 0x4, offset = 0x4, fixed_abs, tag = 'smem constant byte address 0x4 - core index']
  #allocation1 [shape = 'u32[144,128]{1,0:T(1,128)}', space=vmem, size = 0x12000, scoped, tag = 'internal scratch']
  #allocation2 [shape = 'f32[2,128,8]{2,1,0:T(8,128)}', space=vmem, size = 0x20000, scoped, tag = 'scratch operand']
  #allocation3 [shape = 'f32[2,128,1]{2,1,0:T(8,128)}', space=vmem, size = 0x20000, scoped, tag = 'scratch operand']
  %s0 = inlined_call_operand.vmem [shape: f32[128,2], index: 0, kind: input, shape index: {}]
  %s1 = inlined_call_operand.vmem [shape: f32[2,128], index: 1, kind: input, shape index: {}]
  %s2 = inlined_call_operand.vmem [shape: f32[2,128,8], index: 2, kind: input, shape index: {}]
  %s3 = inlined_call_operand.vmem [shape: s8[128,128], index: 3, kind: input, shape index: {}]
  %s4 = inlined_call_operand.vmem [shape: f32[2,128,8], index: 4, kind: output, shape index: {}]
  %s5 = sld [smem:[#allocation0]]
  $region34: #{_spgat_forward.2} parent=0
    _
  %s7 = ssub.s32 1, %s5
  %s8 = scalar_select 0, %s7, %s5
  // Predicated region
  $region2: #{_spgat_forward.2} parent=0 // pred_check
    _
  $region3: #{_spgat_forward.2} parent=0 // pred_check_branch
    %10 = sbr.rel (0) target = $region5
  $region4: #{_spgat_forward.2} parent=0 // pred_region
    _
  $region5: #{_spgat_forward.2} parent=0 // pred_fallthru
    _
  // Predicated region
  $region6: #{_spgat_forward.2} parent=0 // pred_check
    _
  $region7: #{_spgat_forward.2} parent=0 // pred_check_branch
    %12 = sbr.rel (0) target = $region9
  $region8: #{_spgat_forward.2} parent=0 // pred_region
    _
  $region9: #{_spgat_forward.2} parent=0 // pred_fallthru
    _
  // Predicated region
  $region10: #{_spgat_forward.2} parent=0 // pred_check
    _
  $region11: #{_spgat_forward.2} parent=0 // pred_check_branch
    %14 = sbr.rel (0) target = $region13
  $region12: #{_spgat_forward.2} parent=0 // pred_region
    _
  $region13: #{_spgat_forward.2} parent=0 // pred_fallthru
    _
  // Predicated region
  $region14: #{_spgat_forward.2} parent=0 // pred_check
    _
  $region15: #{_spgat_forward.2} parent=0 // pred_check_branch
    %16 = sbr.rel (0) target = $region17
  $region16: #{_spgat_forward.2} parent=0 // pred_region
    _
  $region17: #{_spgat_forward.2} parent=0 // pred_fallthru
    _
  %p17 = scmp.eq.s32.totalorder 0, 0
  // Predicated region
  $region18: #{_spgat_forward.2} parent=0 // pred_check
    %p18 = pneg %p17
  $region19: #{_spgat_forward.2} parent=0 // pred_check_branch
    %20 = sbr.rel (%p18) target = $region21
  $region20: #{_spgat_forward.2} parent=0 // pred_region
    %vm21 = vcmask 64512
    %22 = vst.msk [vmem:[#allocation2] sm:$0xff] %vm21, 0.0
    %23 = vst.msk [vmem:[#allocation2 + $0x8] sm:$0xff] %vm21, 0.0
    %24 = vst.msk [vmem:[#allocation2 + $0x10] sm:$0xff] %vm21, 0.0
    %25 = vst.msk [vmem:[#allocation2 + $0x18] sm:$0xff] %vm21, 0.0
    %26 = vst.msk [vmem:[#allocation2 + $0x20] sm:$0xff] %vm21, 0.0
    %27 = vst.msk [vmem:[#allocation2 + $0x28] sm:$0xff] %vm21, 0.0
    %28 = vst.msk [vmem:[#allocation2 + $0x30] sm:$0xff] %vm21, 0.0
    %29 = vst.msk [vmem:[#allocation2 + $0x38] sm:$0xff] %vm21, 0.0
    %30 = vst.msk [vmem:[#allocation2 + $0x40] sm:$0xff] %vm21, 0.0
    %31 = vst.msk [vmem:[#allocation2 + $0x48] sm:$0xff] %vm21, 0.0
    %32 = vst.msk [vmem:[#allocation2 + $0x50] sm:$0xff] %vm21, 0.0
    %33 = vst.msk [vmem:[#allocation2 + $0x58] sm:$0xff] %vm21, 0.0
    %34 = vst.msk [vmem:[#allocation2 + $0x60] sm:$0xff] %vm21, 0.0
    %35 = vst.msk [vmem:[#allocation2 + $0x68] sm:$0xff] %vm21, 0.0
    %36 = vst.msk [vmem:[#allocation2 + $0x70] sm:$0xff] %vm21, 0.0
    %37 = vst.msk [vmem:[#allocation2 + $0x78] sm:$0xff] %vm21, 0.0
    %38 = vst.msk [vmem:[#allocation2 + $0x80] sm:$0xff] %vm21, 0.0
    %39 = vst.msk [vmem:[#allocation2 + $0x88] sm:$0xff] %vm21, 0.0
    %40 = vst.msk [vmem:[#allocation2 + $0x90] sm:$0xff] %vm21, 0.0
    %41 = vst.msk [vmem:[#allocation2 + $0x98] sm:$0xff] %vm21, 0.0
    %42 = vst.msk [vmem:[#allocation2 + $0xa0] sm:$0xff] %vm21, 0.0
    %43 = vst.msk [vmem:[#allocation2 + $0xa8] sm:$0xff] %vm21, 0.0
    %44 = vst.msk [vmem:[#allocation2 + $0xb0] sm:$0xff] %vm21, 0.0
    %45 = vst.msk [vmem:[#allocation2 + $0xb8] sm:$0xff] %vm21, 0.0
    %46 = vst.msk [vmem:[#allocation2 + $0xc0] sm:$0xff] %vm21, 0.0
    %47 = vst.msk [vmem:[#allocation2 + $0xc8] sm:$0xff] %vm21, 0.0
    %48 = vst.msk [vmem:[#allocation2 + $0xd0] sm:$0xff] %vm21, 0.0
    %49 = vst.msk [vmem:[#allocation2 + $0xd8] sm:$0xff] %vm21, 0.0
    %50 = vst.msk [vmem:[#allocation2 + $0xe0] sm:$0xff] %vm21, 0.0
    %51 = vst.msk [vmem:[#allocation2 + $0xe8] sm:$0xff] %vm21, 0.0
    %52 = vst.msk [vmem:[#allocation2 + $0xf0] sm:$0xff] %vm21, 0.0
    %53 = vst.msk [vmem:[#allocation2 + $0xf8] sm:$0xff] %vm21, 0.0
    %vm54 = vcmask 7168
    %55 = vst.msk [vmem:[#allocation3] sm:$0xff] %vm54, 0.0
    %56 = vst.msk [vmem:[#allocation3 + $0x8] sm:$0xff] %vm54, 0.0
    %57 = vst.msk [vmem:[#allocation3 + $0x10] sm:$0xff] %vm54, 0.0
    %58 = vst.msk [vmem:[#allocation3 + $0x18] sm:$0xff] %vm54, 0.0
    %59 = vst.msk [vmem:[#allocation3 + $0x20] sm:$0xff] %vm54, 0.0
    %60 = vst.msk [vmem:[#allocation3 + $0x28] sm:$0xff] %vm54, 0.0
    %61 = vst.msk [vmem:[#allocation3 + $0x30] sm:$0xff] %vm54, 0.0
    %62 = vst.msk [vmem:[#allocation3 + $0x38] sm:$0xff] %vm54, 0.0
    %63 = vst.msk [vmem:[#allocation3 + $0x40] sm:$0xff] %vm54, 0.0
    %64 = vst.msk [vmem:[#allocation3 + $0x48] sm:$0xff] %vm54, 0.0
    %65 = vst.msk [vmem:[#allocation3 + $0x50] sm:$0xff] %vm54, 0.0
    %66 = vst.msk [vmem:[#allocation3 + $0x58] sm:$0xff] %vm54, 0.0
    %67 = vst.msk [vmem:[#allocation3 + $0x60] sm:$0xff] %vm54, 0.0
    %68 = vst.msk [vmem:[#allocation3 + $0x68] sm:$0xff] %vm54, 0.0
    %69 = vst.msk [vmem:[#allocation3 + $0x70] sm:$0xff] %vm54, 0.0
    %70 = vst.msk [vmem:[#allocation3 + $0x78] sm:$0xff] %vm54, 0.0
    %71 = vst.msk [vmem:[#allocation3 + $0x80] sm:$0xff] %vm54, 0.0
    %72 = vst.msk [vmem:[#allocation3 + $0x88] sm:$0xff] %vm54, 0.0
    %73 = vst.msk [vmem:[#allocation3 + $0x90] sm:$0xff] %vm54, 0.0
    %74 = vst.msk [vmem:[#allocation3 + $0x98] sm:$0xff] %vm54, 0.0
    %75 = vst.msk [vmem:[#allocation3 + $0xa0] sm:$0xff] %vm54, 0.0
    %76 = vst.msk [vmem:[#allocation3 + $0xa8] sm:$0xff] %vm54, 0.0
    %77 = vst.msk [vmem:[#allocation3 + $0xb0] sm:$0xff] %vm54, 0.0
    %78 = vst.msk [vmem:[#allocation3 + $0xb8] sm:$0xff] %vm54, 0.0
    %79 = vst.msk [vmem:[#allocation3 + $0xc0] sm:$0xff] %vm54, 0.0
    %80 = vst.msk [vmem:[#allocation3 + $0xc8] sm:$0xff] %vm54, 0.0
    %81 = vst.msk [vmem:[#allocation3 + $0xd0] sm:$0xff] %vm54, 0.0
    %82 = vst.msk [vmem:[#allocation3 + $0xd8] sm:$0xff] %vm54, 0.0
    %83 = vst.msk [vmem:[#allocation3 + $0xe0] sm:$0xff] %vm54, 0.0
    %84 = vst.msk [vmem:[#allocation3 + $0xe8] sm:$0xff] %vm54, 0.0
    %85 = vst.msk [vmem:[#allocation3 + $0xf0] sm:$0xff] %vm54, 0.0
    %86 = vst.msk [vmem:[#allocation3 + $0xf8] sm:$0xff] %vm54, 0.0
  $region21: #{_spgat_forward.2} parent=0 // pred_fallthru
    _
  %v87 = vld [vmem:[%s3] sm:$0x3]
  %v88 = vld [vmem:[%s3 + $0x2] sm:$0x3]
  %v89 = vld [vmem:[%s3 + $0x4] sm:$0x3]
  %v90 = vld [vmem:[%s3 + $0x6] sm:$0x3]
  %v91 = vld [vmem:[%s3 + $0x8] sm:$0x3]
  %v92 = vld [vmem:[%s3 + $0xa] sm:$0x3]
  %v93 = vld [vmem:[%s3 + $0xc] sm:$0x3]
  %v94 = vld [vmem:[%s3 + $0xe] sm:$0x3]
  %v95 = vld [vmem:[%s3 + $0x10] sm:$0x3]
  %v96 = vld [vmem:[%s3 + $0x12] sm:$0x3]
  %v97 = vld [vmem:[%s3 + $0x14] sm:$0x3]
  %v98 = vld [vmem:[%s3 + $0x16] sm:$0x3]
  %v99 = vld [vmem:[%s3 + $0x18] sm:$0x3]
  %v100 = vld [vmem:[%s3 + $0x1a] sm:$0x3]
  %v101 = vld [vmem:[%s3 + $0x1c] sm:$0x3]
  %v102 = vld [vmem:[%s3 + $0x1e] sm:$0x3]
  %v103 = vunpack.c.0.s8 %v87
  %v104 = vunpack.c.0.s8 %v88
  %v105 = vunpack.c.0.s8 %v89
  %v106 = vunpack.c.0.s8 %v90
  %v107 = vunpack.c.0.s8 %v91
  %v108 = vunpack.c.0.s8 %v92
  %v109 = vunpack.c.0.s8 %v93
  %v110 = vunpack.c.0.s8 %v94
  %v111 = vunpack.c.0.s8 %v95
  %v112 = vunpack.c.0.s8 %v96
  %v113 = vunpack.c.0.s8 %v97
  %v114 = vunpack.c.0.s8 %v98
  %v115 = vunpack.c.0.s8 %v99
  %v116 = vunpack.c.0.s8 %v100
  %v117 = vunpack.c.0.s8 %v101
  %v118 = vunpack.c.0.s8 %v102
  %v119 = vcvt.s32.f32 %v103
  %v120 = vcvt.s32.f32 %v104
  %v121 = vcvt.s32.f32 %v105
  %v122 = vcvt.s32.f32 %v106
  %v123 = vcvt.s32.f32 %v107
  %v124 = vcvt.s32.f32 %v108
  %v125 = vcvt.s32.f32 %v109
  %v126 = vcvt.s32.f32 %v110
  %v127 = vcvt.s32.f32 %v111
  %v128 = vcvt.s32.f32 %v112
  %v129 = vcvt.s32.f32 %v113
  %v130 = vcvt.s32.f32 %v114
  %v131 = vcvt.s32.f32 %v115
  %v132 = vcvt.s32.f32 %v116
  %v133 = vcvt.s32.f32 %v117
  %v134 = vcvt.s32.f32 %v118
  %v135 = vld [vmem:[%s0] sm:$0xff]
  %v136 = vld [vmem:[%s0 + $0x8] sm:$0xff]
  %v137 = vld [vmem:[%s0 + $0x10] sm:$0xff]
  %v138 = vld [vmem:[%s0 + $0x18] sm:$0xff]
  %v139 = vld [vmem:[%s0 + $0x20] sm:$0xff]
  %v140 = vld [vmem:[%s0 + $0x28] sm:$0xff]
  %v141 = vld [vmem:[%s0 + $0x30] sm:$0xff]
  %v142 = vld [vmem:[%s0 + $0x38] sm:$0xff]
  %v143 = vld [vmem:[%s0 + $0x40] sm:$0xff]
  %v144 = vld [vmem:[%s0 + $0x48] sm:$0xff]
  %v145 = vld [vmem:[%s0 + $0x50] sm:$0xff]
  %v146 = vld [vmem:[%s0 + $0x58] sm:$0xff]
  %v147 = vld [vmem:[%s0 + $0x60] sm:$0xff]
  %v148 = vld [vmem:[%s0 + $0x68] sm:$0xff]
  %v149 = vld [vmem:[%s0 + $0x70] sm:$0xff]
  %v150 = vld [vmem:[%s0 + $0x78] sm:$0xff]
  %v151 = vld [vmem:[%s1] sm:$0x3]
  %153 = vset.pattern.permute.xlu0 0
  %154 = vperm.xlu0 %153, %v135
  %v155 = vpop.permute.xlu0 %154
  %158 = vset.pattern.permute.xlu0 0
  %159 = vperm.xlu0 %158, %v136
  %v160 = vpop.permute.xlu0 %159
  %163 = vset.pattern.permute.xlu0 0
  %164 = vperm.xlu0 %163, %v137
  %v165 = vpop.permute.xlu0 %164
  %168 = vset.pattern.permute.xlu0 0
  %169 = vperm.xlu0 %168, %v138
  %v170 = vpop.permute.xlu0 %169
  %173 = vset.pattern.permute.xlu0 0
  %174 = vperm.xlu0 %173, %v139
  %v175 = vpop.permute.xlu0 %174
  %178 = vset.pattern.permute.xlu0 0
  %179 = vperm.xlu0 %178, %v140
  %v180 = vpop.permute.xlu0 %179
  %183 = vset.pattern.permute.xlu0 0
  %184 = vperm.xlu0 %183, %v141
  %v185 = vpop.permute.xlu0 %184
  %188 = vset.pattern.permute.xlu0 0
  %189 = vperm.xlu0 %188, %v142
  %v190 = vpop.permute.xlu0 %189
  %193 = vset.pattern.permute.xlu0 0
  %194 = vperm.xlu0 %193, %v143
  %v195 = vpop.permute.xlu0 %194
  %198 = vset.pattern.permute.xlu0 0
  %199 = vperm.xlu0 %198, %v144
  %v200 = vpop.permute.xlu0 %199
  %203 = vset.pattern.permute.xlu0 0
  %204 = vperm.xlu0 %203, %v145
  %v205 = vpop.permute.xlu0 %204
  %208 = vset.pattern.permute.xlu0 0
  %209 = vperm.xlu0 %208, %v146
  %v210 = vpop.permute.xlu0 %209
  %213 = vset.pattern.permute.xlu0 0
  %214 = vperm.xlu0 %213, %v147
  %v215 = vpop.permute.xlu0 %214
  %218 = vset.pattern.permute.xlu0 0
  %219 = vperm.xlu0 %218, %v148
  %v220 = vpop.permute.xlu0 %219
  %223 = vset.pattern.permute.xlu0 0
  %224 = vperm.xlu0 %223, %v149
  %v225 = vpop.permute.xlu0 %224
  %228 = vset.pattern.permute.xlu0 0
  %229 = vperm.xlu0 %228, %v150
  %v230 = vpop.permute.xlu0 %229
  %v232 = vlaneseq
  %v233 = vshrl.u32 %v232, 7
  %v234 = vsub.s32 0, %v233
  %v235 = vrot.slane %v151, %v234
  %v236 = vadd.f32 %v155, %v235
  %v237 = vadd.f32 %v160, %v235
  %v238 = vadd.f32 %v165, %v235
  %v239 = vadd.f32 %v170, %v235
  %v240 = vadd.f32 %v175, %v235
  %v241 = vadd.f32 %v180, %v235
  %v242 = vadd.f32 %v185, %v235
  %v243 = vadd.f32 %v190, %v235
  %v244 = vadd.f32 %v195, %v235
  %v245 = vadd.f32 %v200, %v235
  %v246 = vadd.f32 %v205, %v235
  %v247 = vadd.f32 %v210, %v235
  %v248 = vadd.f32 %v215, %v235
  %v249 = vadd.f32 %v220, %v235
  %v250 = vadd.f32 %v225, %v235
  %v251 = vadd.f32 %v230, %v235
  %v252 = vmul.f32 %v236, 0.2
  %v253 = vmul.f32 %v237, 0.2
  %v254 = vmul.f32 %v238, 0.2
  %v255 = vmul.f32 %v239, 0.2
  %v256 = vmul.f32 %v240, 0.2
  %v257 = vmul.f32 %v241, 0.2
  %v258 = vmul.f32 %v242, 0.2
  %v259 = vmul.f32 %v243, 0.2
  %v260 = vmul.f32 %v244, 0.2
  %v261 = vmul.f32 %v245, 0.2
  %v262 = vmul.f32 %v246, 0.2
  %v263 = vmul.f32 %v247, 0.2
  %v264 = vmul.f32 %v248, 0.2
  %v265 = vmul.f32 %v249, 0.2
  %v266 = vmul.f32 %v250, 0.2
  %v267 = vmul.f32 %v251, 0.2
  %v268 = vmax.f32 %v236, %v252
  %v269 = vmax.f32 %v237, %v253
  %v270 = vmax.f32 %v238, %v254
  %v271 = vmax.f32 %v239, %v255
  %v272 = vmax.f32 %v240, %v256
  %v273 = vmax.f32 %v241, %v257
  %v274 = vmax.f32 %v242, %v258
  %v275 = vmax.f32 %v243, %v259
  %v276 = vmax.f32 %v244, %v260
  %v277 = vmax.f32 %v245, %v261
  %v278 = vmax.f32 %v246, %v262
  %v279 = vmax.f32 %v247, %v263
  %v280 = vmax.f32 %v248, %v264
  %v281 = vmax.f32 %v249, %v265
  %v282 = vmax.f32 %v250, %v266
  %v283 = vmax.f32 %v251, %v267
  %v284 = vsub.f32 0.0, %v268
  %v285 = vsub.f32 0.0, %v269
  %v286 = vsub.f32 0.0, %v270
  %v287 = vsub.f32 0.0, %v271
  %v288 = vsub.f32 0.0, %v272
  %v289 = vsub.f32 0.0, %v273
  %v290 = vsub.f32 0.0, %v274
  %v291 = vsub.f32 0.0, %v275
  %v292 = vsub.f32 0.0, %v276
  %v293 = vsub.f32 0.0, %v277
  %v294 = vsub.f32 0.0, %v278
  %v295 = vsub.f32 0.0, %v279
  %v296 = vsub.f32 0.0, %v280
  %v297 = vsub.f32 0.0, %v281
  %v298 = vsub.f32 0.0, %v282
  %v299 = vsub.f32 0.0, %v283
  %v300 = vmul.f32 %v284, 1.442695
  %v301 = vpow.pop %v300
  %v302 = vmul.f32 %v285, 1.442695
  %v303 = vpow.pop %v302
  %v304 = vmul.f32 %v286, 1.442695
  %v305 = vpow.pop %v304
  %v306 = vmul.f32 %v287, 1.442695
  %v307 = vpow.pop %v306
  %v308 = vmul.f32 %v288, 1.442695
  %v309 = vpow.pop %v308
  %v310 = vmul.f32 %v289, 1.442695
  %v311 = vpow.pop %v310
  %v312 = vmul.f32 %v290, 1.442695
  %v313 = vpow.pop %v312
  %v314 = vmul.f32 %v291, 1.442695
  %v315 = vpow.pop %v314
  %v316 = vmul.f32 %v292, 1.442695
  %v317 = vpow.pop %v316
  %v318 = vmul.f32 %v293, 1.442695
  %v319 = vpow.pop %v318
  %v320 = vmul.f32 %v294, 1.442695
  %v321 = vpow.pop %v320
  %v322 = vmul.f32 %v295, 1.442695
  %v323 = vpow.pop %v322
  %v324 = vmul.f32 %v296, 1.442695
  %v325 = vpow.pop %v324
  %v326 = vmul.f32 %v297, 1.442695
  %v327 = vpow.pop %v326
  %v328 = vmul.f32 %v298, 1.442695
  %v329 = vpow.pop %v328
  %v330 = vmul.f32 %v299, 1.442695
  %v331 = vpow.pop %v330
  %v332 = vmul.f32 %v301, %v119
  %v333 = vmul.f32 %v303, %v120
  %v334 = vmul.f32 %v305, %v121
  %v335 = vmul.f32 %v307, %v122
  %v336 = vmul.f32 %v309, %v123
  %v337 = vmul.f32 %v311, %v124
  %v338 = vmul.f32 %v313, %v125
  %v339 = vmul.f32 %v315, %v126
  %v340 = vmul.f32 %v317, %v127
  %v341 = vmul.f32 %v319, %v128
  %v342 = vmul.f32 %v321, %v129
  %v343 = vmul.f32 %v323, %v130
  %v344 = vmul.f32 %v325, %v131
  %v345 = vmul.f32 %v327, %v132
  %v346 = vmul.f32 %v329, %v133
  %v347 = vmul.f32 %v331, %v134
  %v348 = vld [vmem:[#allocation3] sm:$0xff]
  %v349 = vld [vmem:[#allocation3 + $0x8] sm:$0xff]
  %v350 = vld [vmem:[#allocation3 + $0x10] sm:$0xff]
  %v351 = vld [vmem:[#allocation3 + $0x18] sm:$0xff]
  %v352 = vld [vmem:[#allocation3 + $0x20] sm:$0xff]
  %v353 = vld [vmem:[#allocation3 + $0x28] sm:$0xff]
  %v354 = vld [vmem:[#allocation3 + $0x30] sm:$0xff]
  %v355 = vld [vmem:[#allocation3 + $0x38] sm:$0xff]
  %v356 = vld [vmem:[#allocation3 + $0x40] sm:$0xff]
  %v357 = vld [vmem:[#allocation3 + $0x48] sm:$0xff]
  %v358 = vld [vmem:[#allocation3 + $0x50] sm:$0xff]
  %v359 = vld [vmem:[#allocation3 + $0x58] sm:$0xff]
  %v360 = vld [vmem:[#allocation3 + $0x60] sm:$0xff]
  %v361 = vld [vmem:[#allocation3 + $0x68] sm:$0xff]
  %v362 = vld [vmem:[#allocation3 + $0x70] sm:$0xff]
  %v363 = vld [vmem:[#allocation3 + $0x78] sm:$0xff]
  %364 = vadd.xlane.f32.xlu0 %v332
  %v365 = vpop.xlane.xlu0 %364
  %366 = vadd.xlane.f32.xlu0 %v333
  %v367 = vpop.xlane.xlu0 %366
  %368 = vadd.xlane.f32.xlu0 %v334
  %v369 = vpop.xlane.xlu0 %368
  %370 = vadd.xlane.f32.xlu0 %v335
  %v371 = vpop.xlane.xlu0 %370
  %372 = vadd.xlane.f32.xlu0 %v336
  %v373 = vpop.xlane.xlu0 %372
  %374 = vadd.xlane.f32.xlu0 %v337
  %v375 = vpop.xlane.xlu0 %374
  %376 = vadd.xlane.f32.xlu0 %v338
  %v377 = vpop.xlane.xlu0 %376
  %378 = vadd.xlane.f32.xlu0 %v339
  %v379 = vpop.xlane.xlu0 %378
  %380 = vadd.xlane.f32.xlu0 %v340
  %v381 = vpop.xlane.xlu0 %380
  %382 = vadd.xlane.f32.xlu0 %v341
  %v383 = vpop.xlane.xlu0 %382
  %384 = vadd.xlane.f32.xlu0 %v342
  %v385 = vpop.xlane.xlu0 %384
  %386 = vadd.xlane.f32.xlu0 %v343
  %v387 = vpop.xlane.xlu0 %386
  %388 = vadd.xlane.f32.xlu0 %v344
  %v389 = vpop.xlane.xlu0 %388
  %390 = vadd.xlane.f32.xlu0 %v345
  %v391 = vpop.xlane.xlu0 %390
  %392 = vadd.xlane.f32.xlu0 %v346
  %v393 = vpop.xlane.xlu0 %392
  %394 = vadd.xlane.f32.xlu0 %v347
  %v395 = vpop.xlane.xlu0 %394
  %v396 = vadd.f32 %v348, %v365
  %v397 = vadd.f32 %v349, %v367
  %v398 = vadd.f32 %v350, %v369
  %v399 = vadd.f32 %v351, %v371
  %v400 = vadd.f32 %v352, %v373
  %v401 = vadd.f32 %v353, %v375
  %v402 = vadd.f32 %v354, %v377
  %v403 = vadd.f32 %v355, %v379
  %v404 = vadd.f32 %v356, %v381
  %v405 = vadd.f32 %v357, %v383
  %v406 = vadd.f32 %v358, %v385
  %v407 = vadd.f32 %v359, %v387
  %v408 = vadd.f32 %v360, %v389
  %v409 = vadd.f32 %v361, %v391
  %v410 = vadd.f32 %v362, %v393
  %v411 = vadd.f32 %v363, %v395
  %vm412 = vcmask 7168
  %413 = vst.msk [vmem:[#allocation3] sm:$0xff] %vm412, %v396
  %414 = vst.msk [vmem:[#allocation3 + $0x8] sm:$0xff] %vm412, %v397
  %415 = vst.msk [vmem:[#allocation3 + $0x10] sm:$0xff] %vm412, %v398
  %416 = vst.msk [vmem:[#allocation3 + $0x18] sm:$0xff] %vm412, %v399
  %417 = vst.msk [vmem:[#allocation3 + $0x20] sm:$0xff] %vm412, %v400
  %418 = vst.msk [vmem:[#allocation3 + $0x28] sm:$0xff] %vm412, %v401
  %419 = vst.msk [vmem:[#allocation3 + $0x30] sm:$0xff] %vm412, %v402
  %420 = vst.msk [vmem:[#allocation3 + $0x38] sm:$0xff] %vm412, %v403
  %421 = vst.msk [vmem:[#allocation3 + $0x40] sm:$0xff] %vm412, %v404
  %422 = vst.msk [vmem:[#allocation3 + $0x48] sm:$0xff] %vm412, %v405
  %423 = vst.msk [vmem:[#allocation3 + $0x50] sm:$0xff] %vm412, %v406
  %424 = vst.msk [vmem:[#allocation3 + $0x58] sm:$0xff] %vm412, %v407
  %425 = vst.msk [vmem:[#allocation3 + $0x60] sm:$0xff] %vm412, %v408
  %426 = vst.msk [vmem:[#allocation3 + $0x68] sm:$0xff] %vm412, %v409
  %427 = vst.msk [vmem:[#allocation3 + $0x70] sm:$0xff] %vm412, %v410
  %428 = vst.msk [vmem:[#allocation3 + $0x78] sm:$0xff] %vm412, %v411
  %v429 = vld [vmem:[#allocation2] sm:$0xff]
  %v430 = vld [vmem:[#allocation2 + $0x8] sm:$0xff]
  %v431 = vld [vmem:[#allocation2 + $0x10] sm:$0xff]
  %v432 = vld [vmem:[#allocation2 + $0x18] sm:$0xff]
  %v433 = vld [vmem:[#allocation2 + $0x20] sm:$0xff]
  %v434 = vld [vmem:[#allocation2 + $0x28] sm:$0xff]
  %v435 = vld [vmem:[#allocation2 + $0x30] sm:$0xff]
  %v436 = vld [vmem:[#allocation2 + $0x38] sm:$0xff]
  %v437 = vld [vmem:[#allocation2 + $0x40] sm:$0xff]
  %v438 = vld [vmem:[#allocation2 + $0x48] sm:$0xff]
  %v439 = vld [vmem:[#allocation2 + $0x50] sm:$0xff]
  %v440 = vld [vmem:[#allocation2 + $0x58] sm:$0xff]
  %v441 = vld [vmem:[#allocation2 + $0x60] sm:$0xff]
  %v442 = vld [vmem:[#allocation2 + $0x68] sm:$0xff]
  %v443 = vld [vmem:[#allocation2 + $0x70] sm:$0xff]
  %v444 = vld [vmem:[#allocation2 + $0x78] sm:$0xff]
  %v445 = vld [vmem:[%s2] sm:$0xff]
  %v446 = vld [vmem:[%s2 + $0x8] sm:$0xff]
  %v447 = vld [vmem:[%s2 + $0x10] sm:$0xff]
  %v448 = vld [vmem:[%s2 + $0x18] sm:$0xff]
  %v449 = vld [vmem:[%s2 + $0x20] sm:$0xff]
  %v450 = vld [vmem:[%s2 + $0x28] sm:$0xff]
  %v451 = vld [vmem:[%s2 + $0x30] sm:$0xff]
  %v452 = vld [vmem:[%s2 + $0x38] sm:$0xff]
  %v453 = vld [vmem:[%s2 + $0x40] sm:$0xff]
  %v454 = vld [vmem:[%s2 + $0x48] sm:$0xff]
  %v455 = vld [vmem:[%s2 + $0x50] sm:$0xff]
  %v456 = vld [vmem:[%s2 + $0x58] sm:$0xff]
  %v457 = vld [vmem:[%s2 + $0x60] sm:$0xff]
  %v458 = vld [vmem:[%s2 + $0x68] sm:$0xff]
  %v459 = vld [vmem:[%s2 + $0x70] sm:$0xff]
  %v460 = vld [vmem:[%s2 + $0x78] sm:$0xff]
  %461 = vmatprep.subr.mxu0 0.0
  %462 = vmatpush1.msra.mxu0 %v445
  %463 = vmatprep.subr.mxu0 0.0
  %464 = vmatpush1.msra.mxu0 %v446
  %465 = vmatprep.subr.mxu0 0.0
  %466 = vmatpush1.msra.mxu0 %v447
  %467 = vmatprep.subr.mxu0 0.0
  %468 = vmatpush1.msra.mxu0 %v448
  %469 = vmatprep.subr.mxu0 0.0
  %470 = vmatpush1.msra.mxu0 %v449
  %471 = vmatprep.subr.mxu0 0.0
  %472 = vmatpush1.msra.mxu0 %v450
  %473 = vmatprep.subr.mxu0 0.0
  %474 = vmatpush1.msra.mxu0 %v451
  %475 = vmatprep.subr.mxu0 0.0
  %476 = vmatpush1.msra.mxu0 %v452
  %477 = vmatprep.subr.mxu0 0.0
  %478 = vmatpush1.msra.mxu0 %v453
  %479 = vmatprep.subr.mxu0 0.0
  %480 = vmatpush1.msra.mxu0 %v454
  %481 = vmatprep.subr.mxu0 0.0
  %482 = vmatpush1.msra.mxu0 %v455
  %483 = vmatprep.subr.mxu0 0.0
  %484 = vmatpush1.msra.mxu0 %v456
  %485 = vmatprep.subr.mxu0 0.0
  %486 = vmatpush1.msra.mxu0 %v457
  %487 = vmatprep.subr.mxu0 0.0
  %488 = vmatpush1.msra.mxu0 %v458
  %489 = vmatprep.subr.mxu0 0.0
  %490 = vmatpush1.msra.mxu0 %v459
  %491 = vmatprep.subr.mxu0 0.0
  %492 = vmatpush1.msra.mxu0 %v460
  %493 = vmatprep.subr.mxu0 0.0
  %494 = vmatpush1.msra.mxu0 0.0
  %495 = vmatprep.subr.mxu0 0.0
  %496 = vmatpush1.msra.mxu0 0.0
  %497 = vmatprep.subr.mxu0 0.0
  %498 = vmatpush1.msra.mxu0 0.0
  %499 = vmatprep.subr.mxu0 0.0
  %500 = vmatpush1.msra.mxu0 0.0
  %501 = vmatprep.subr.mxu0 0.0
  %502 = vmatpush1.msra.mxu0 0.0
  %503 = vmatprep.subr.mxu0 0.0
  %504 = vmatpush1.msra.mxu0 0.0
  %505 = vmatprep.subr.mxu0 0.0
  %506 = vmatpush1.msra.mxu0 0.0
  %507 = vmatprep.subr.mxu0 0.0
  %508 = vmatpush1.msra.mxu0 0.0
  %509 = vmatprep.subr.mxu0 0.0
  %510 = vmatpush1.msra.mxu0 0.0
  %511 = vmatprep.subr.mxu0 0.0
  %512 = vmatpush1.msra.mxu0 0.0
  %513 = vmatprep.subr.mxu0 0.0
  %514 = vmatpush1.msra.mxu0 0.0
  %515 = vmatprep.subr.mxu0 0.0
  %516 = vmatpush1.msra.mxu0 0.0
  %517 = vmatprep.subr.mxu0 0.0
  %518 = vmatpush1.msra.mxu0 0.0
  %519 = vmatprep.subr.mxu0 0.0
  %520 = vmatpush1.msra.mxu0 0.0
  %521 = vmatprep.subr.mxu0 0.0
  %522 = vmatpush1.msra.mxu0 0.0
  %523 = vmatprep.subr.mxu0 0.0
  %524 = vmatpush1.msra.mxu0 0.0
  %525 = vmatprep.mubr.f32.mxu0 0.0
  %526 = vmatmul.mubr.f32.gmra.mrb[0].mxu0 %v332
  %v527 = vpop.f32.mrb[0].mxu0
  %v528 = vadd.f32 0.0, %v527
  %v529 = vpop.f32.mrb[0].mxu0
  %530 = vmatprep.mubr.f32.mxu0 0.0
  %531 = vmatmul.mubr.f32.gmra.mrb[0].mxu0 %v333
  %v532 = vpop.f32.mrb[0].mxu0
  %v533 = vadd.f32 0.0, %v532
  %v534 = vpop.f32.mrb[0].mxu0
  %535 = vmatprep.mubr.f32.mxu0 0.0
  %536 = vmatmul.mubr.f32.gmra.mrb[0].mxu0 %v334
  %v537 = vpop.f32.mrb[0].mxu0
  %v538 = vadd.f32 0.0, %v537
  %v539 = vpop.f32.mrb[0].mxu0
  %540 = vmatprep.mubr.f32.mxu0 0.0
  %541 = vmatmul.mubr.f32.gmra.mrb[0].mxu0 %v335
  %v542 = vpop.f32.mrb[0].mxu0
  %v543 = vadd.f32 0.0, %v542
  %v544 = vpop.f32.mrb[0].mxu0
  %545 = vmatprep.mubr.f32.mxu0 0.0
  %546 = vmatmul.mubr.f32.gmra.mrb[0].mxu0 %v336
  %v547 = vpop.f32.mrb[0].mxu0
  %v548 = vadd.f32 0.0, %v547
  %v549 = vpop.f32.mrb[0].mxu0
  %550 = vmatprep.mubr.f32.mxu0 0.0
  %551 = vmatmul.mubr.f32.gmra.mrb[0].mxu0 %v337
  %v552 = vpop.f32.mrb[0].mxu0
  %v553 = vadd.f32 0.0, %v552
  %v554 = vpop.f32.mrb[0].mxu0
  %555 = vmatprep.mubr.f32.mxu0 0.0
  %556 = vmatmul.mubr.f32.gmra.mrb[0].mxu0 %v338
  %v557 = vpop.f32.mrb[0].mxu0
  %v558 = vadd.f32 0.0, %v557
  %v559 = vpop.f32.mrb[0].mxu0
  %560 = vmatprep.mubr.f32.mxu0 0.0
  %561 = vmatmul.mubr.f32.gmra.mrb[0].mxu0 %v339
  %v562 = vpop.f32.mrb[0].mxu0
  %v563 = vadd.f32 0.0, %v562
  %v564 = vpop.f32.mrb[0].mxu0
  %565 = vmatprep.mubr.f32.mxu0 0.0
  %566 = vmatmul.mubr.f32.gmra.mrb[0].mxu0 %v340
  %v567 = vpop.f32.mrb[0].mxu0
  %v568 = vadd.f32 0.0, %v567
  %v569 = vpop.f32.mrb[0].mxu0
  %570 = vmatprep.mubr.f32.mxu0 0.0
  %571 = vmatmul.mubr.f32.gmra.mrb[0].mxu0 %v341
  %v572 = vpop.f32.mrb[0].mxu0
  %v573 = vadd.f32 0.0, %v572
  %v574 = vpop.f32.mrb[0].mxu0
  %575 = vmatprep.mubr.f32.mxu0 0.0
  %576 = vmatmul.mubr.f32.gmra.mrb[0].mxu0 %v342
  %v577 = vpop.f32.mrb[0].mxu0
  %v578 = vadd.f32 0.0, %v577
  %v579 = vpop.f32.mrb[0].mxu0
  %580 = vmatprep.mubr.f32.mxu0 0.0
  %581 = vmatmul.mubr.f32.gmra.mrb[0].mxu0 %v343
  %v582 = vpop.f32.mrb[0].mxu0
  %v583 = vadd.f32 0.0, %v582
  %v584 = vpop.f32.mrb[0].mxu0
  %585 = vmatprep.mubr.f32.mxu0 0.0
  %586 = vmatmul.mubr.f32.gmra.mrb[0].mxu0 %v344
  %v587 = vpop.f32.mrb[0].mxu0
  %v588 = vadd.f32 0.0, %v587
  %v589 = vpop.f32.mrb[0].mxu0
  %590 = vmatprep.mubr.f32.mxu0 0.0
  %591 = vmatmul.mubr.f32.gmra.mrb[0].mxu0 %v345
  %v592 = vpop.f32.mrb[0].mxu0
  %v593 = vadd.f32 0.0, %v592
  %v594 = vpop.f32.mrb[0].mxu0
  %595 = vmatprep.mubr.f32.mxu0 0.0
  %596 = vmatmul.mubr.f32.gmra.mrb[0].mxu0 %v346
  %v597 = vpop.f32.mrb[0].mxu0
  %v598 = vadd.f32 0.0, %v597
  %v599 = vpop.f32.mrb[0].mxu0
  %600 = vmatprep.mubr.f32.mxu0 0.0
  %601 = vmatmul.mubr.f32.gmra.mrb[0].mxu0 %v347
  %v602 = vpop.f32.mrb[0].mxu0
  %v603 = vadd.f32 0.0, %v602
  %v604 = vpop.f32.mrb[0].mxu0
  %605 = vdwg.mxu0
  %v606 = vadd.f32 %v429, %v528
  %v607 = vadd.f32 %v430, %v533
  %v608 = vadd.f32 %v431, %v538
  %v609 = vadd.f32 %v432, %v543
  %v610 = vadd.f32 %v433, %v548
  %v611 = vadd.f32 %v434, %v553
  %v612 = vadd.f32 %v435, %v558
  %v613 = vadd.f32 %v436, %v563
  %v614 = vadd.f32 %v437, %v568
  %v615 = vadd.f32 %v438, %v573
  %v616 = vadd.f32 %v439, %v578
  %v617 = vadd.f32 %v440, %v583
  %v618 = vadd.f32 %v441, %v588
  %v619 = vadd.f32 %v442, %v593
  %v620 = vadd.f32 %v443, %v598
  %v621 = vadd.f32 %v444, %v603
  %vm622 = vcmask 64512
  %623 = vst.msk [vmem:[#allocation2] sm:$0xff] %vm622, %v606
  %624 = vst.msk [vmem:[#allocation2 + $0x8] sm:$0xff] %vm622, %v607
  %625 = vst.msk [vmem:[#allocation2 + $0x10] sm:$0xff] %vm622, %v608
  %626 = vst.msk [vmem:[#allocation2 + $0x18] sm:$0xff] %vm622, %v609
  %627 = vst.msk [vmem:[#allocation2 + $0x20] sm:$0xff] %vm622, %v610
  %628 = vst.msk [vmem:[#allocation2 + $0x28] sm:$0xff] %vm622, %v611
  %629 = vst.msk [vmem:[#allocation2 + $0x30] sm:$0xff] %vm622, %v612
  %630 = vst.msk [vmem:[#allocation2 + $0x38] sm:$0xff] %vm622, %v613
  %631 = vst.msk [vmem:[#allocation2 + $0x40] sm:$0xff] %vm622, %v614
  %632 = vst.msk [vmem:[#allocation2 + $0x48] sm:$0xff] %vm622, %v615
  %633 = vst.msk [vmem:[#allocation2 + $0x50] sm:$0xff] %vm622, %v616
  %634 = vst.msk [vmem:[#allocation2 + $0x58] sm:$0xff] %vm622, %v617
  %635 = vst.msk [vmem:[#allocation2 + $0x60] sm:$0xff] %vm622, %v618
  %636 = vst.msk [vmem:[#allocation2 + $0x68] sm:$0xff] %vm622, %v619
  %637 = vst.msk [vmem:[#allocation2 + $0x70] sm:$0xff] %vm622, %v620
  %638 = vst.msk [vmem:[#allocation2 + $0x78] sm:$0xff] %vm622, %v621
  %639 = vset.pattern.permute.xlu0 1
  %640 = vperm.xlu0 %639, %v135
  %v641 = vpop.permute.xlu0 %640
  %643 = vset.pattern.permute.xlu0 1
  %644 = vperm.xlu0 %643, %v136
  %v645 = vpop.permute.xlu0 %644
  %647 = vset.pattern.permute.xlu0 1
  %648 = vperm.xlu0 %647, %v137
  %v649 = vpop.permute.xlu0 %648
  %651 = vset.pattern.permute.xlu0 1
  %652 = vperm.xlu0 %651, %v138
  %v653 = vpop.permute.xlu0 %652
  %655 = vset.pattern.permute.xlu0 1
  %656 = vperm.xlu0 %655, %v139
  %v657 = vpop.permute.xlu0 %656
  %659 = vset.pattern.permute.xlu0 1
  %660 = vperm.xlu0 %659, %v140
  %v661 = vpop.permute.xlu0 %660
  %663 = vset.pattern.permute.xlu0 1
  %664 = vperm.xlu0 %663, %v141
  %v665 = vpop.permute.xlu0 %664
  %667 = vset.pattern.permute.xlu0 1
  %668 = vperm.xlu0 %667, %v142
  %v669 = vpop.permute.xlu0 %668
  %671 = vset.pattern.permute.xlu0 1
  %672 = vperm.xlu0 %671, %v143
  %v673 = vpop.permute.xlu0 %672
  %675 = vset.pattern.permute.xlu0 1
  %676 = vperm.xlu0 %675, %v144
  %v677 = vpop.permute.xlu0 %676
  %679 = vset.pattern.permute.xlu0 1
  %680 = vperm.xlu0 %679, %v145
  %v681 = vpop.permute.xlu0 %680
  %683 = vset.pattern.permute.xlu0 1
  %684 = vperm.xlu0 %683, %v146
  %v685 = vpop.permute.xlu0 %684
  %687 = vset.pattern.permute.xlu0 1
  %688 = vperm.xlu0 %687, %v147
  %v689 = vpop.permute.xlu0 %688
  %691 = vset.pattern.permute.xlu0 1
  %692 = vperm.xlu0 %691, %v148
  %v693 = vpop.permute.xlu0 %692
  %695 = vset.pattern.permute.xlu0 1
  %696 = vperm.xlu0 %695, %v149
  %v697 = vpop.permute.xlu0 %696
  %699 = vset.pattern.permute.xlu0 1
  %700 = vperm.xlu0 %699, %v150
  %v701 = vpop.permute.xlu0 %700
  %v703 = vlaneseq
  %v704 = vshrl.u32 %v703, 7
  %v705 = vsub.s32 1, %v704
  %v706 = vrot.slane %v151, %v705
  %v707 = vadd.f32 %v641, %v706
  %v708 = vadd.f32 %v645, %v706
  %v709 = vadd.f32 %v649, %v706
  %v710 = vadd.f32 %v653, %v706
  %v711 = vadd.f32 %v657, %v706
  %v712 = vadd.f32 %v661, %v706
  %v713 = vadd.f32 %v665, %v706
  %v714 = vadd.f32 %v669, %v706
  %v715 = vadd.f32 %v673, %v706
  %v716 = vadd.f32 %v677, %v706
  %v717 = vadd.f32 %v681, %v706
  %v718 = vadd.f32 %v685, %v706
  %v719 = vadd.f32 %v689, %v706
  %v720 = vadd.f32 %v693, %v706
  %v721 = vadd.f32 %v697, %v706
  %v722 = vadd.f32 %v701, %v706
  %v723 = vmul.f32 %v707, 0.2
  %v724 = vmul.f32 %v708, 0.2
  %v725 = vmul.f32 %v709, 0.2
  %v726 = vmul.f32 %v710, 0.2
  %v727 = vmul.f32 %v711, 0.2
  %v728 = vmul.f32 %v712, 0.2
  %v729 = vmul.f32 %v713, 0.2
  %v730 = vmul.f32 %v714, 0.2
  %v731 = vmul.f32 %v715, 0.2
  %v732 = vmul.f32 %v716, 0.2
  %v733 = vmul.f32 %v717, 0.2
  %v734 = vmul.f32 %v718, 0.2
  %v735 = vmul.f32 %v719, 0.2
  %v736 = vmul.f32 %v720, 0.2
  %v737 = vmul.f32 %v721, 0.2
  %v738 = vmul.f32 %v722, 0.2
  %v739 = vmax.f32 %v707, %v723
  %v740 = vmax.f32 %v708, %v724
  %v741 = vmax.f32 %v709, %v725
  %v742 = vmax.f32 %v710, %v726
  %v743 = vmax.f32 %v711, %v727
  %v744 = vmax.f32 %v712, %v728
  %v745 = vmax.f32 %v713, %v729
  %v746 = vmax.f32 %v714, %v730
  %v747 = vmax.f32 %v715, %v731
  %v748 = vmax.f32 %v716, %v732
  %v749 = vmax.f32 %v717, %v733
  %v750 = vmax.f32 %v718, %v734
  %v751 = vmax.f32 %v719, %v735
  %v752 = vmax.f32 %v720, %v736
  %v753 = vmax.f32 %v721, %v737
  %v754 = vmax.f32 %v722, %v738
  %v755 = vsub.f32 0.0, %v739
  %v756 = vsub.f32 0.0, %v740
  %v757 = vsub.f32 0.0, %v741
  %v758 = vsub.f32 0.0, %v742
  %v759 = vsub.f32 0.0, %v743
  %v760 = vsub.f32 0.0, %v744
  %v761 = vsub.f32 0.0, %v745
  %v762 = vsub.f32 0.0, %v746
  %v763 = vsub.f32 0.0, %v747
  %v764 = vsub.f32 0.0, %v748
  %v765 = vsub.f32 0.0, %v749
  %v766 = vsub.f32 0.0, %v750
  %v767 = vsub.f32 0.0, %v751
  %v768 = vsub.f32 0.0, %v752
  %v769 = vsub.f32 0.0, %v753
  %v770 = vsub.f32 0.0, %v754
  %v771 = vmul.f32 %v755, 1.442695
  %v772 = vpow.pop %v771
  %v773 = vmul.f32 %v756, 1.442695
  %v774 = vpow.pop %v773
  %v775 = vmul.f32 %v757, 1.442695
  %v776 = vpow.pop %v775
  %v777 = vmul.f32 %v758, 1.442695
  %v778 = vpow.pop %v777
  %v779 = vmul.f32 %v759, 1.442695
  %v780 = vpow.pop %v779
  %v781 = vmul.f32 %v760, 1.442695
  %v782 = vpow.pop %v781
  %v783 = vmul.f32 %v761, 1.442695
  %v784 = vpow.pop %v783
  %v785 = vmul.f32 %v762, 1.442695
  %v786 = vpow.pop %v785
  %v787 = vmul.f32 %v763, 1.442695
  %v788 = vpow.pop %v787
  %v789 = vmul.f32 %v764, 1.442695
  %v790 = vpow.pop %v789
  %v791 = vmul.f32 %v765, 1.442695
  %v792 = vpow.pop %v791
  %v793 = vmul.f32 %v766, 1.442695
  %v794 = vpow.pop %v793
  %v795 = vmul.f32 %v767, 1.442695
  %v796 = vpow.pop %v795
  %v797 = vmul.f32 %v768, 1.442695
  %v798 = vpow.pop %v797
  %v799 = vmul.f32 %v769, 1.442695
  %v800 = vpow.pop %v799
  %v801 = vmul.f32 %v770, 1.442695
  %v802 = vpow.pop %v801
  %v803 = vmul.f32 %v772, %v119
  %v804 = vmul.f32 %v774, %v120
  %v805 = vmul.f32 %v776, %v121
  %v806 = vmul.f32 %v778, %v122
  %v807 = vmul.f32 %v780, %v123
  %v808 = vmul.f32 %v782, %v124
  %v809 = vmul.f32 %v784, %v125
  %v810 = vmul.f32 %v786, %v126
  %v811 = vmul.f32 %v788, %v127
  %v812 = vmul.f32 %v790, %v128
  %v813 = vmul.f32 %v792, %v129
  %v814 = vmul.f32 %v794, %v130
  %v815 = vmul.f32 %v796, %v131
  %v816 = vmul.f32 %v798, %v132
  %v817 = vmul.f32 %v800, %v133
  %v818 = vmul.f32 %v802, %v134
  %s819 = scalar_lea.vmem [#allocation3], 128
  %v820 = vld [vmem:[%s819] sm:$0xff]
  %v821 = vld [vmem:[%s819 + $0x8] sm:$0xff]
  %v822 = vld [vmem:[%s819 + $0x10] sm:$0xff]
  %v823 = vld [vmem:[%s819 + $0x18] sm:$0xff]
  %v824 = vld [vmem:[%s819 + $0x20] sm:$0xff]
  %v825 = vld [vmem:[%s819 + $0x28] sm:$0xff]
  %v826 = vld [vmem:[%s819 + $0x30] sm:$0xff]
  %v827 = vld [vmem:[%s819 + $0x38] sm:$0xff]
  %v828 = vld [vmem:[%s819 + $0x40] sm:$0xff]
  %v829 = vld [vmem:[%s819 + $0x48] sm:$0xff]
  %v830 = vld [vmem:[%s819 + $0x50] sm:$0xff]
  %v831 = vld [vmem:[%s819 + $0x58] sm:$0xff]
  %v832 = vld [vmem:[%s819 + $0x60] sm:$0xff]
  %v833 = vld [vmem:[%s819 + $0x68] sm:$0xff]
  %v834 = vld [vmem:[%s819 + $0x70] sm:$0xff]
  %v835 = vld [vmem:[%s819 + $0x78] sm:$0xff]
  %836 = vadd.xlane.f32.xlu0 %v803
  %v837 = vpop.xlane.xlu0 %836
  %838 = vadd.xlane.f32.xlu0 %v804
  %v839 = vpop.xlane.xlu0 %838
  %840 = vadd.xlane.f32.xlu0 %v805
  %v841 = vpop.xlane.xlu0 %840
  %842 = vadd.xlane.f32.xlu0 %v806
  %v843 = vpop.xlane.xlu0 %842
  %844 = vadd.xlane.f32.xlu0 %v807
  %v845 = vpop.xlane.xlu0 %844
  %846 = vadd.xlane.f32.xlu0 %v808
  %v847 = vpop.xlane.xlu0 %846
  %848 = vadd.xlane.f32.xlu0 %v809
  %v849 = vpop.xlane.xlu0 %848
  %850 = vadd.xlane.f32.xlu0 %v810
  %v851 = vpop.xlane.xlu0 %850
  %852 = vadd.xlane.f32.xlu0 %v811
  %v853 = vpop.xlane.xlu0 %852
  %854 = vadd.xlane.f32.xlu0 %v812
  %v855 = vpop.xlane.xlu0 %854
  %856 = vadd.xlane.f32.xlu0 %v813
  %v857 = vpop.xlane.xlu0 %856
  %858 = vadd.xlane.f32.xlu0 %v814
  %v859 = vpop.xlane.xlu0 %858
  %860 = vadd.xlane.f32.xlu0 %v815
  %v861 = vpop.xlane.xlu0 %860
  %862 = vadd.xlane.f32.xlu0 %v816
  %v863 = vpop.xlane.xlu0 %862
  %864 = vadd.xlane.f32.xlu0 %v817
  %v865 = vpop.xlane.xlu0 %864
  %866 = vadd.xlane.f32.xlu0 %v818
  %v867 = vpop.xlane.xlu0 %866
  %v868 = vadd.f32 %v820, %v837
  %v869 = vadd.f32 %v821, %v839
  %v870 = vadd.f32 %v822, %v841
  %v871 = vadd.f32 %v823, %v843
  %v872 = vadd.f32 %v824, %v845
  %v873 = vadd.f32 %v825, %v847
  %v874 = vadd.f32 %v826, %v849
  %v875 = vadd.f32 %v827, %v851
  %v876 = vadd.f32 %v828, %v853
  %v877 = vadd.f32 %v829, %v855
  %v878 = vadd.f32 %v830, %v857
  %v879 = vadd.f32 %v831, %v859
  %v880 = vadd.f32 %v832, %v861
  %v881 = vadd.f32 %v833, %v863
  %v882 = vadd.f32 %v834, %v865
  %v883 = vadd.f32 %v835, %v867
  %884 = vst.msk [vmem:[%s819] sm:$0xff] %vm412, %v868
  %885 = vst.msk [vmem:[%s819 + $0x8] sm:$0xff] %vm412, %v869
  %886 = vst.msk [vmem:[%s819 + $0x10] sm:$0xff] %vm412, %v870
  %887 = vst.msk [vmem:[%s819 + $0x18] sm:$0xff] %vm412, %v871
  %888 = vst.msk [vmem:[%s819 + $0x20] sm:$0xff] %vm412, %v872
  %889 = vst.msk [vmem:[%s819 + $0x28] sm:$0xff] %vm412, %v873
  %890 = vst.msk [vmem:[%s819 + $0x30] sm:$0xff] %vm412, %v874
  %891 = vst.msk [vmem:[%s819 + $0x38] sm:$0xff] %vm412, %v875
  %892 = vst.msk [vmem:[%s819 + $0x40] sm:$0xff] %vm412, %v876
  %893 = vst.msk [vmem:[%s819 + $0x48] sm:$0xff] %vm412, %v877
  %894 = vst.msk [vmem:[%s819 + $0x50] sm:$0xff] %vm412, %v878
  %895 = vst.msk [vmem:[%s819 + $0x58] sm:$0xff] %vm412, %v879
  %896 = vst.msk [vmem:[%s819 + $0x60] sm:$0xff] %vm412, %v880
  %897 = vst.msk [vmem:[%s819 + $0x68] sm:$0xff] %vm412, %v881
  %898 = vst.msk [vmem:[%s819 + $0x70] sm:$0xff] %vm412, %v882
  %899 = vst.msk [vmem:[%s819 + $0x78] sm:$0xff] %vm412, %v883
  %s900 = scalar_lea.vmem [#allocation2], 128
  %v901 = vld [vmem:[%s900] sm:$0xff]
  %v902 = vld [vmem:[%s900 + $0x8] sm:$0xff]
  %v903 = vld [vmem:[%s900 + $0x10] sm:$0xff]
  %v904 = vld [vmem:[%s900 + $0x18] sm:$0xff]
  %v905 = vld [vmem:[%s900 + $0x20] sm:$0xff]
  %v906 = vld [vmem:[%s900 + $0x28] sm:$0xff]
  %v907 = vld [vmem:[%s900 + $0x30] sm:$0xff]
  %v908 = vld [vmem:[%s900 + $0x38] sm:$0xff]
  %v909 = vld [vmem:[%s900 + $0x40] sm:$0xff]
  %v910 = vld [vmem:[%s900 + $0x48] sm:$0xff]
  %v911 = vld [vmem:[%s900 + $0x50] sm:$0xff]
  %v912 = vld [vmem:[%s900 + $0x58] sm:$0xff]
  %v913 = vld [vmem:[%s900 + $0x60] sm:$0xff]
  %v914 = vld [vmem:[%s900 + $0x68] sm:$0xff]
  %v915 = vld [vmem:[%s900 + $0x70] sm:$0xff]
  %v916 = vld [vmem:[%s900 + $0x78] sm:$0xff]
  %s917 = scalar_lea.vmem %s2, 128
  %v918 = vld [vmem:[%s917] sm:$0xff]
  %v919 = vld [vmem:[%s917 + $0x8] sm:$0xff]
  %v920 = vld [vmem:[%s917 + $0x10] sm:$0xff]
  %v921 = vld [vmem:[%s917 + $0x18] sm:$0xff]
  %v922 = vld [vmem:[%s917 + $0x20] sm:$0xff]
  %v923 = vld [vmem:[%s917 + $0x28] sm:$0xff]
  %v924 = vld [vmem:[%s917 + $0x30] sm:$0xff]
  %v925 = vld [vmem:[%s917 + $0x38] sm:$0xff]
  %v926 = vld [vmem:[%s917 + $0x40] sm:$0xff]
  %v927 = vld [vmem:[%s917 + $0x48] sm:$0xff]
  %v928 = vld [vmem:[%s917 + $0x50] sm:$0xff]
  %v929 = vld [vmem:[%s917 + $0x58] sm:$0xff]
  %v930 = vld [vmem:[%s917 + $0x60] sm:$0xff]
  %v931 = vld [vmem:[%s917 + $0x68] sm:$0xff]
  %v932 = vld [vmem:[%s917 + $0x70] sm:$0xff]
  %v933 = vld [vmem:[%s917 + $0x78] sm:$0xff]
  %934 = vmatprep.subr.mxu0 0.0
  %935 = vmatpush1.msra.mxu0 %v918
  %936 = vmatprep.subr.mxu0 0.0
  %937 = vmatpush1.msra.mxu0 %v919
  %938 = vmatprep.subr.mxu0 0.0
  %939 = vmatpush1.msra.mxu0 %v920
  %940 = vmatprep.subr.mxu0 0.0
  %941 = vmatpush1.msra.mxu0 %v921
  %942 = vmatprep.subr.mxu0 0.0
  %943 = vmatpush1.msra.mxu0 %v922
  %944 = vmatprep.subr.mxu0 0.0
  %945 = vmatpush1.msra.mxu0 %v923
  %946 = vmatprep.subr.mxu0 0.0
  %947 = vmatpush1.msra.mxu0 %v924
  %948 = vmatprep.subr.mxu0 0.0
  %949 = vmatpush1.msra.mxu0 %v925
  %950 = vmatprep.subr.mxu0 0.0
  %951 = vmatpush1.msra.mxu0 %v926
  %952 = vmatprep.subr.mxu0 0.0
  %953 = vmatpush1.msra.mxu0 %v927
  %954 = vmatprep.subr.mxu0 0.0
  %955 = vmatpush1.msra.mxu0 %v928
  %956 = vmatprep.subr.mxu0 0.0
  %957 = vmatpush1.msra.mxu0 %v929
  %958 = vmatprep.subr.mxu0 0.0
  %959 = vmatpush1.msra.mxu0 %v930
  %960 = vmatprep.subr.mxu0 0.0
  %961 = vmatpush1.msra.mxu0 %v931
  %962 = vmatprep.subr.mxu0 0.0
  %963 = vmatpush1.msra.mxu0 %v932
  %964 = vmatprep.subr.mxu0 0.0
  %965 = vmatpush1.msra.mxu0 %v933
  %966 = vmatprep.subr.mxu0 0.0
  %967 = vmatpush1.msra.mxu0 0.0
  %968 = vmatprep.subr.mxu0 0.0
  %969 = vmatpush1.msra.mxu0 0.0
  %970 = vmatprep.subr.mxu0 0.0
  %971 = vmatpush1.msra.mxu0 0.0
  %972 = vmatprep.subr.mxu0 0.0
  %973 = vmatpush1.msra.mxu0 0.0
  %974 = vmatprep.subr.mxu0 0.0
  %975 = vmatpush1.msra.mxu0 0.0
  %976 = vmatprep.subr.mxu0 0.0
  %977 = vmatpush1.msra.mxu0 0.0
  %978 = vmatprep.subr.mxu0 0.0
  %979 = vmatpush1.msra.mxu0 0.0
  %980 = vmatprep.subr.mxu0 0.0
  %981 = vmatpush1.msra.mxu0 0.0
  %982 = vmatprep.subr.mxu0 0.0
  %983 = vmatpush1.msra.mxu0 0.0
  %984 = vmatprep.subr.mxu0 0.0
  %985 = vmatpush1.msra.mxu0 0.0
  %986 = vmatprep.subr.mxu0 0.0
  %987 = vmatpush1.msra.mxu0 0.0
  %988 = vmatprep.subr.mxu0 0.0
  %989 = vmatpush1.msra.mxu0 0.0
  %990 = vmatprep.subr.mxu0 0.0
  %991 = vmatpush1.msra.mxu0 0.0
  %992 = vmatprep.subr.mxu0 0.0
  %993 = vmatpush1.msra.mxu0 0.0
  %994 = vmatprep.subr.mxu0 0.0
  %995 = vmatpush1.msra.mxu0 0.0
  %996 = vmatprep.subr.mxu0 0.0
  %997 = vmatpush1.msra.mxu0 0.0
  %998 = vmatprep.mubr.f32.mxu0 0.0
  %999 = vmatmul.mubr.f32.gmra.mrb[0].mxu0 %v803
  %v1000 = vpop.f32.mrb[0].mxu0
  %v1001 = vadd.f32 0.0, %v1000
  %v1002 = vpop.f32.mrb[0].mxu0
  %1003 = vmatprep.mubr.f32.mxu0 0.0
  %1004 = vmatmul.mubr.f32.gmra.mrb[0].mxu0 %v804
  %v1005 = vpop.f32.mrb[0].mxu0
  %v1006 = vadd.f32 0.0, %v1005
  %v1007 = vpop.f32.mrb[0].mxu0
  %1008 = vmatprep.mubr.f32.mxu0 0.0
  %1009 = vmatmul.mubr.f32.gmra.mrb[0].mxu0 %v805
  %v1010 = vpop.f32.mrb[0].mxu0
  %v1011 = vadd.f32 0.0, %v1010
  %v1012 = vpop.f32.mrb[0].mxu0
  %1013 = vmatprep.mubr.f32.mxu0 0.0
  %1014 = vmatmul.mubr.f32.gmra.mrb[0].mxu0 %v806
  %v1015 = vpop.f32.mrb[0].mxu0
  %v1016 = vadd.f32 0.0, %v1015
  %v1017 = vpop.f32.mrb[0].mxu0
  %1018 = vmatprep.mubr.f32.mxu0 0.0
  %1019 = vmatmul.mubr.f32.gmra.mrb[0].mxu0 %v807
  %v1020 = vpop.f32.mrb[0].mxu0
  %v1021 = vadd.f32 0.0, %v1020
  %v1022 = vpop.f32.mrb[0].mxu0
  %1023 = vmatprep.mubr.f32.mxu0 0.0
  %1024 = vmatmul.mubr.f32.gmra.mrb[0].mxu0 %v808
  %v1025 = vpop.f32.mrb[0].mxu0
  %v1026 = vadd.f32 0.0, %v1025
  %v1027 = vpop.f32.mrb[0].mxu0
  %1028 = vmatprep.mubr.f32.mxu0 0.0
  %1029 = vmatmul.mubr.f32.gmra.mrb[0].mxu0 %v809
  %v1030 = vpop.f32.mrb[0].mxu0
  %v1031 = vadd.f32 0.0, %v1030
  %v1032 = vpop.f32.mrb[0].mxu0
  %1033 = vmatprep.mubr.f32.mxu0 0.0
  %1034 = vmatmul.mubr.f32.gmra.mrb[0].mxu0 %v810
  %v1035 = vpop.f32.mrb[0].mxu0
  %v1036 = vadd.f32 0.0, %v1035
  %v1037 = vpop.f32.mrb[0].mxu0
  %1038 = vmatprep.mubr.f32.mxu0 0.0
  %1039 = vmatmul.mubr.f32.gmra.mrb[0].mxu0 %v811
  %v1040 = vpop.f32.mrb[0].mxu0
  %v1041 = vadd.f32 0.0, %v1040
  %v1042 = vpop.f32.mrb[0].mxu0
  %1043 = vmatprep.mubr.f32.mxu0 0.0
  %1044 = vmatmul.mubr.f32.gmra.mrb[0].mxu0 %v812
  %v1045 = vpop.f32.mrb[0].mxu0
  %v1046 = vadd.f32 0.0, %v1045
  %v1047 = vpop.f32.mrb[0].mxu0
  %1048 = vmatprep.mubr.f32.mxu0 0.0
  %1049 = vmatmul.mubr.f32.gmra.mrb[0].mxu0 %v813
  %v1050 = vpop.f32.mrb[0].mxu0
  %v1051 = vadd.f32 0.0, %v1050
  %v1052 = vpop.f32.mrb[0].mxu0
  %1053 = vmatprep.mubr.f32.mxu0 0.0
  %1054 = vmatmul.mubr.f32.gmra.mrb[0].mxu0 %v814
  %v1055 = vpop.f32.mrb[0].mxu0
  %v1056 = vadd.f32 0.0, %v1055
  %v1057 = vpop.f32.mrb[0].mxu0
  %1058 = vmatprep.mubr.f32.mxu0 0.0
  %1059 = vmatmul.mubr.f32.gmra.mrb[0].mxu0 %v815
  %v1060 = vpop.f32.mrb[0].mxu0
  %v1061 = vadd.f32 0.0, %v1060
  %v1062 = vpop.f32.mrb[0].mxu0
  %1063 = vmatprep.mubr.f32.mxu0 0.0
  %1064 = vmatmul.mubr.f32.gmra.mrb[0].mxu0 %v816
  %v1065 = vpop.f32.mrb[0].mxu0
  %v1066 = vadd.f32 0.0, %v1065
  %v1067 = vpop.f32.mrb[0].mxu0
  %1068 = vmatprep.mubr.f32.mxu0 0.0
  %1069 = vmatmul.mubr.f32.gmra.mrb[0].mxu0 %v817
  %v1070 = vpop.f32.mrb[0].mxu0
  %v1071 = vadd.f32 0.0, %v1070
  %v1072 = vpop.f32.mrb[0].mxu0
  %1073 = vmatprep.mubr.f32.mxu0 0.0
  %1074 = vmatmul.mubr.f32.gmra.mrb[0].mxu0 %v818
  %v1075 = vpop.f32.mrb[0].mxu0
  %v1076 = vadd.f32 0.0, %v1075
  %v1077 = vpop.f32.mrb[0].mxu0
  %1078 = vdwg.mxu0
  %v1079 = vadd.f32 %v901, %v1001
  %v1080 = vadd.f32 %v902, %v1006
  %v1081 = vadd.f32 %v903, %v1011
  %v1082 = vadd.f32 %v904, %v1016
  %v1083 = vadd.f32 %v905, %v1021
  %v1084 = vadd.f32 %v906, %v1026
  %v1085 = vadd.f32 %v907, %v1031
  %v1086 = vadd.f32 %v908, %v1036
  %v1087 = vadd.f32 %v909, %v1041
  %v1088 = vadd.f32 %v910, %v1046
  %v1089 = vadd.f32 %v911, %v1051
  %v1090 = vadd.f32 %v912, %v1056
  %v1091 = vadd.f32 %v913, %v1061
  %v1092 = vadd.f32 %v914, %v1066
  %v1093 = vadd.f32 %v915, %v1071
  %v1094 = vadd.f32 %v916, %v1076
  %1095 = vst.msk [vmem:[%s900] sm:$0xff] %vm622, %v1079
  %1096 = vst.msk [vmem:[%s900 + $0x8] sm:$0xff] %vm622, %v1080
  %1097 = vst.msk [vmem:[%s900 + $0x10] sm:$0xff] %vm622, %v1081
  %1098 = vst.msk [vmem:[%s900 + $0x18] sm:$0xff] %vm622, %v1082
  %1099 = vst.msk [vmem:[%s900 + $0x20] sm:$0xff] %vm622, %v1083
  %1100 = vst.msk [vmem:[%s900 + $0x28] sm:$0xff] %vm622, %v1084
  %1101 = vst.msk [vmem:[%s900 + $0x30] sm:$0xff] %vm622, %v1085
  %1102 = vst.msk [vmem:[%s900 + $0x38] sm:$0xff] %vm622, %v1086
  %1103 = vst.msk [vmem:[%s900 + $0x40] sm:$0xff] %vm622, %v1087
  %1104 = vst.msk [vmem:[%s900 + $0x48] sm:$0xff] %vm622, %v1088
  %1105 = vst.msk [vmem:[%s900 + $0x50] sm:$0xff] %vm622, %v1089
  %1106 = vst.msk [vmem:[%s900 + $0x58] sm:$0xff] %vm622, %v1090
  %1107 = vst.msk [vmem:[%s900 + $0x60] sm:$0xff] %vm622, %v1091
  %1108 = vst.msk [vmem:[%s900 + $0x68] sm:$0xff] %vm622, %v1092
  %1109 = vst.msk [vmem:[%s900 + $0x70] sm:$0xff] %vm622, %v1093
  %1110 = vst.msk [vmem:[%s900 + $0x78] sm:$0xff] %vm622, %v1094
  // Predicated region
  $region22: #{_spgat_forward.2} parent=0 // pred_check
    %p1111 = pneg %p17
  $region23: #{_spgat_forward.2} parent=0 // pred_check_branch
    %1113 = sbr.rel (%p1111) target = $region25
  $region24: #{_spgat_forward.2} parent=0 // pred_region
    %v1114 = vld [vmem:[#allocation3] sm:$0xff]
    %v1115 = vld [vmem:[#allocation3 + $0x8] sm:$0xff]
    %v1116 = vld [vmem:[#allocation3 + $0x10] sm:$0xff]
    %v1117 = vld [vmem:[#allocation3 + $0x18] sm:$0xff]
    %v1118 = vld [vmem:[#allocation3 + $0x20] sm:$0xff]
    %v1119 = vld [vmem:[#allocation3 + $0x28] sm:$0xff]
    %v1120 = vld [vmem:[#allocation3 + $0x30] sm:$0xff]
    %v1121 = vld [vmem:[#allocation3 + $0x38] sm:$0xff]
    %v1122 = vld [vmem:[#allocation3 + $0x40] sm:$0xff]
    %v1123 = vld [vmem:[#allocation3 + $0x48] sm:$0xff]
    %v1124 = vld [vmem:[#allocation3 + $0x50] sm:$0xff]
    %v1125 = vld [vmem:[#allocation3 + $0x58] sm:$0xff]
    %v1126 = vld [vmem:[#allocation3 + $0x60] sm:$0xff]
    %v1127 = vld [vmem:[#allocation3 + $0x68] sm:$0xff]
    %v1128 = vld [vmem:[#allocation3 + $0x70] sm:$0xff]
    %v1129 = vld [vmem:[#allocation3 + $0x78] sm:$0xff]
    %v1130 = vrcp.pop %v1114
    %v1131 = vrcp.pop %v1115
    %v1132 = vrcp.pop %v1116
    %v1133 = vrcp.pop %v1117
    %v1134 = vrcp.pop %v1118
    %v1135 = vrcp.pop %v1119
    %v1136 = vrcp.pop %v1120
    %v1137 = vrcp.pop %v1121
    %v1138 = vrcp.pop %v1122
    %v1139 = vrcp.pop %v1123
    %v1140 = vrcp.pop %v1124
    %v1141 = vrcp.pop %v1125
    %v1142 = vrcp.pop %v1126
    %v1143 = vrcp.pop %v1127
    %v1144 = vrcp.pop %v1128
    %v1145 = vrcp.pop %v1129
    %v1146 = vld [vmem:[#allocation2] sm:$0xff]
    %v1147 = vld [vmem:[#allocation2 + $0x8] sm:$0xff]
    %v1148 = vld [vmem:[#allocation2 + $0x10] sm:$0xff]
    %v1149 = vld [vmem:[#allocation2 + $0x18] sm:$0xff]
    %v1150 = vld [vmem:[#allocation2 + $0x20] sm:$0xff]
    %v1151 = vld [vmem:[#allocation2 + $0x28] sm:$0xff]
    %v1152 = vld [vmem:[#allocation2 + $0x30] sm:$0xff]
    %v1153 = vld [vmem:[#allocation2 + $0x38] sm:$0xff]
    %v1154 = vld [vmem:[#allocation2 + $0x40] sm:$0xff]
    %v1155 = vld [vmem:[#allocation2 + $0x48] sm:$0xff]
    %v1156 = vld [vmem:[#allocation2 + $0x50] sm:$0xff]
    %v1157 = vld [vmem:[#allocation2 + $0x58] sm:$0xff]
    %v1158 = vld [vmem:[#allocation2 + $0x60] sm:$0xff]
    %v1159 = vld [vmem:[#allocation2 + $0x68] sm:$0xff]
    %v1160 = vld [vmem:[#allocation2 + $0x70] sm:$0xff]
    %v1161 = vld [vmem:[#allocation2 + $0x78] sm:$0xff]
    %1163 = vset.pattern.permute.xlu0 0
    %1164 = vperm.xlu0 %1163, %v1130
    %v1165 = vpop.permute.xlu0 %1164
    %1168 = vset.pattern.permute.xlu0 0
    %1169 = vperm.xlu0 %1168, %v1131
    %v1170 = vpop.permute.xlu0 %1169
    %1173 = vset.pattern.permute.xlu0 0
    %1174 = vperm.xlu0 %1173, %v1132
    %v1175 = vpop.permute.xlu0 %1174
    %1178 = vset.pattern.permute.xlu0 0
    %1179 = vperm.xlu0 %1178, %v1133
    %v1180 = vpop.permute.xlu0 %1179
    %1183 = vset.pattern.permute.xlu0 0
    %1184 = vperm.xlu0 %1183, %v1134
    %v1185 = vpop.permute.xlu0 %1184
    %1188 = vset.pattern.permute.xlu0 0
    %1189 = vperm.xlu0 %1188, %v1135
    %v1190 = vpop.permute.xlu0 %1189
    %1193 = vset.pattern.permute.xlu0 0
    %1194 = vperm.xlu0 %1193, %v1136
    %v1195 = vpop.permute.xlu0 %1194
    %1198 = vset.pattern.permute.xlu0 0
    %1199 = vperm.xlu0 %1198, %v1137
    %v1200 = vpop.permute.xlu0 %1199
    %1203 = vset.pattern.permute.xlu0 0
    %1204 = vperm.xlu0 %1203, %v1138
    %v1205 = vpop.permute.xlu0 %1204
    %1208 = vset.pattern.permute.xlu0 0
    %1209 = vperm.xlu0 %1208, %v1139
    %v1210 = vpop.permute.xlu0 %1209
    %1213 = vset.pattern.permute.xlu0 0
    %1214 = vperm.xlu0 %1213, %v1140
    %v1215 = vpop.permute.xlu0 %1214
    %1218 = vset.pattern.permute.xlu0 0
    %1219 = vperm.xlu0 %1218, %v1141
    %v1220 = vpop.permute.xlu0 %1219
    %1223 = vset.pattern.permute.xlu0 0
    %1224 = vperm.xlu0 %1223, %v1142
    %v1225 = vpop.permute.xlu0 %1224
    %1228 = vset.pattern.permute.xlu0 0
    %1229 = vperm.xlu0 %1228, %v1143
    %v1230 = vpop.permute.xlu0 %1229
    %1233 = vset.pattern.permute.xlu0 0
    %1234 = vperm.xlu0 %1233, %v1144
    %v1235 = vpop.permute.xlu0 %1234
    %1238 = vset.pattern.permute.xlu0 0
    %1239 = vperm.xlu0 %1238, %v1145
    %v1240 = vpop.permute.xlu0 %1239
    %v1242 = vmul.f32 %v1146, %v1165
    %v1243 = vmul.f32 %v1147, %v1170
    %v1244 = vmul.f32 %v1148, %v1175
    %v1245 = vmul.f32 %v1149, %v1180
    %v1246 = vmul.f32 %v1150, %v1185
    %v1247 = vmul.f32 %v1151, %v1190
    %v1248 = vmul.f32 %v1152, %v1195
    %v1249 = vmul.f32 %v1153, %v1200
    %v1250 = vmul.f32 %v1154, %v1205
    %v1251 = vmul.f32 %v1155, %v1210
    %v1252 = vmul.f32 %v1156, %v1215
    %v1253 = vmul.f32 %v1157, %v1220
    %v1254 = vmul.f32 %v1158, %v1225
    %v1255 = vmul.f32 %v1159, %v1230
    %v1256 = vmul.f32 %v1160, %v1235
    %v1257 = vmul.f32 %v1161, %v1240
    %vm1258 = vcmp.gt.f32.partialorder %v1242, 0.0
    %vm1259 = vcmp.gt.f32.partialorder %v1243, 0.0
    %vm1260 = vcmp.gt.f32.partialorder %v1244, 0.0
    %vm1261 = vcmp.gt.f32.partialorder %v1245, 0.0
    %vm1262 = vcmp.gt.f32.partialorder %v1246, 0.0
    %vm1263 = vcmp.gt.f32.partialorder %v1247, 0.0
    %vm1264 = vcmp.gt.f32.partialorder %v1248, 0.0
    %vm1265 = vcmp.gt.f32.partialorder %v1249, 0.0
    %vm1266 = vcmp.gt.f32.partialorder %v1250, 0.0
    %vm1267 = vcmp.gt.f32.partialorder %v1251, 0.0
    %vm1268 = vcmp.gt.f32.partialorder %v1252, 0.0
    %vm1269 = vcmp.gt.f32.partialorder %v1253, 0.0
    %vm1270 = vcmp.gt.f32.partialorder %v1254, 0.0
    %vm1271 = vcmp.gt.f32.partialorder %v1255, 0.0
    %vm1272 = vcmp.gt.f32.partialorder %v1256, 0.0
    %vm1273 = vcmp.gt.f32.partialorder %v1257, 0.0
    %v1274 = vmul.f32 %v1242, 1.442695
    %v1275 = vpow.pop %v1274
    %v1276 = vmul.f32 %v1243, 1.442695
    %v1277 = vpow.pop %v1276
    %v1278 = vmul.f32 %v1244, 1.442695
    %v1279 = vpow.pop %v1278
    %v1280 = vmul.f32 %v1245, 1.442695
    %v1281 = vpow.pop %v1280
    %v1282 = vmul.f32 %v1246, 1.442695
    %v1283 = vpow.pop %v1282
    %v1284 = vmul.f32 %v1247, 1.442695
    %v1285 = vpow.pop %v1284
    %v1286 = vmul.f32 %v1248, 1.442695
    %v1287 = vpow.pop %v1286
    %v1288 = vmul.f32 %v1249, 1.442695
    %v1289 = vpow.pop %v1288
    %v1290 = vmul.f32 %v1250, 1.442695
    %v1291 = vpow.pop %v1290
    %v1292 = vmul.f32 %v1251, 1.442695
    %v1293 = vpow.pop %v1292
    %v1294 = vmul.f32 %v1252, 1.442695
    %v1295 = vpow.pop %v1294
    %v1296 = vmul.f32 %v1253, 1.442695
    %v1297 = vpow.pop %v1296
    %v1298 = vmul.f32 %v1254, 1.442695
    %v1299 = vpow.pop %v1298
    %v1300 = vmul.f32 %v1255, 1.442695
    %v1301 = vpow.pop %v1300
    %v1302 = vmul.f32 %v1256, 1.442695
    %v1303 = vpow.pop %v1302
    %v1304 = vmul.f32 %v1257, 1.442695
    %v1305 = vpow.pop %v1304
    %v1306 = vsub.f32 %v1275, 1.0
    %v1307 = vsub.f32 %v1277, 1.0
    %v1308 = vsub.f32 %v1279, 1.0
    %v1309 = vsub.f32 %v1281, 1.0
    %v1310 = vsub.f32 %v1283, 1.0
    %v1311 = vsub.f32 %v1285, 1.0
    %v1312 = vsub.f32 %v1287, 1.0
    %v1313 = vsub.f32 %v1289, 1.0
    %v1314 = vsub.f32 %v1291, 1.0
    %v1315 = vsub.f32 %v1293, 1.0
    %v1316 = vsub.f32 %v1295, 1.0
    %v1317 = vsub.f32 %v1297, 1.0
    %v1318 = vsub.f32 %v1299, 1.0
    %v1319 = vsub.f32 %v1301, 1.0
    %v1320 = vsub.f32 %v1303, 1.0
    %v1321 = vsub.f32 %v1305, 1.0
    %v1322 = vsel %vm1258, %v1242, %v1306
    %v1323 = vsel %vm1259, %v1243, %v1307
    %v1324 = vsel %vm1260, %v1244, %v1308
    %v1325 = vsel %vm1261, %v1245, %v1309
    %v1326 = vsel %vm1262, %v1246, %v1310
    %v1327 = vsel %vm1263, %v1247, %v1311
    %v1328 = vsel %vm1264, %v1248, %v1312
    %v1329 = vsel %vm1265, %v1249, %v1313
    %v1330 = vsel %vm1266, %v1250, %v1314
    %v1331 = vsel %vm1267, %v1251, %v1315
    %v1332 = vsel %vm1268, %v1252, %v1316
    %v1333 = vsel %vm1269, %v1253, %v1317
    %v1334 = vsel %vm1270, %v1254, %v1318
    %v1335 = vsel %vm1271, %v1255, %v1319
    %v1336 = vsel %vm1272, %v1256, %v1320
    %v1337 = vsel %vm1273, %v1257, %v1321
    %v1338 = vtanh.pop %v1322
    %v1339 = vtanh.pop %v1323
    %v1340 = vtanh.pop %v1324
    %v1341 = vtanh.pop %v1325
    %v1342 = vtanh.pop %v1326
    %v1343 = vtanh.pop %v1327
    %v1344 = vtanh.pop %v1328
    %v1345 = vtanh.pop %v1329
    %v1346 = vtanh.pop %v1330
    %v1347 = vtanh.pop %v1331
    %v1348 = vtanh.pop %v1332
    %v1349 = vtanh.pop %v1333
    %v1350 = vtanh.pop %v1334
    %v1351 = vtanh.pop %v1335
    %v1352 = vtanh.pop %v1336
    %v1353 = vtanh.pop %v1337
    %1354 = vst.msk [vmem:[%s4] sm:$0xff] %vm622, %v1338
    %1355 = vst.msk [vmem:[%s4 + $0x8] sm:$0xff] %vm622, %v1339
    %1356 = vst.msk [vmem:[%s4 + $0x10] sm:$0xff] %vm622, %v1340
    %1357 = vst.msk [vmem:[%s4 + $0x18] sm:$0xff] %vm622, %v1341
    %1358 = vst.msk [vmem:[%s4 + $0x20] sm:$0xff] %vm622, %v1342
    %1359 = vst.msk [vmem:[%s4 + $0x28] sm:$0xff] %vm622, %v1343
    %1360 = vst.msk [vmem:[%s4 + $0x30] sm:$0xff] %vm622, %v1344
    %1361 = vst.msk [vmem:[%s4 + $0x38] sm:$0xff] %vm622, %v1345
    %1362 = vst.msk [vmem:[%s4 + $0x40] sm:$0xff] %vm622, %v1346
    %1363 = vst.msk [vmem:[%s4 + $0x48] sm:$0xff] %vm622, %v1347
    %1364 = vst.msk [vmem:[%s4 + $0x50] sm:$0xff] %vm622, %v1348
    %1365 = vst.msk [vmem:[%s4 + $0x58] sm:$0xff] %vm622, %v1349
    %1366 = vst.msk [vmem:[%s4 + $0x60] sm:$0xff] %vm622, %v1350
    %1367 = vst.msk [vmem:[%s4 + $0x68] sm:$0xff] %vm622, %v1351
    %1368 = vst.msk [vmem:[%s4 + $0x70] sm:$0xff] %vm622, %v1352
    %1369 = vst.msk [vmem:[%s4 + $0x78] sm:$0xff] %vm622, %v1353
    %v1370 = vld [vmem:[%s819] sm:$0xff]
    %v1371 = vld [vmem:[%s819 + $0x8] sm:$0xff]
    %v1372 = vld [vmem:[%s819 + $0x10] sm:$0xff]
    %v1373 = vld [vmem:[%s819 + $0x18] sm:$0xff]
    %v1374 = vld [vmem:[%s819 + $0x20] sm:$0xff]
    %v1375 = vld [vmem:[%s819 + $0x28] sm:$0xff]
    %v1376 = vld [vmem:[%s819 + $0x30] sm:$0xff]
    %v1377 = vld [vmem:[%s819 + $0x38] sm:$0xff]
    %v1378 = vld [vmem:[%s819 + $0x40] sm:$0xff]
    %v1379 = vld [vmem:[%s819 + $0x48] sm:$0xff]
    %v1380 = vld [vmem:[%s819 + $0x50] sm:$0xff]
    %v1381 = vld [vmem:[%s819 + $0x58] sm:$0xff]
    %v1382 = vld [vmem:[%s819 + $0x60] sm:$0xff]
    %v1383 = vld [vmem:[%s819 + $0x68] sm:$0xff]
    %v1384 = vld [vmem:[%s819 + $0x70] sm:$0xff]
    %v1385 = vld [vmem:[%s819 + $0x78] sm:$0xff]
    %v1386 = vrcp.pop %v1370
    %v1387 = vrcp.pop %v1371
    %v1388 = vrcp.pop %v1372
    %v1389 = vrcp.pop %v1373
    %v1390 = vrcp.pop %v1374
    %v1391 = vrcp.pop %v1375
    %v1392 = vrcp.pop %v1376
    %v1393 = vrcp.pop %v1377
    %v1394 = vrcp.pop %v1378
    %v1395 = vrcp.pop %v1379
    %v1396 = vrcp.pop %v1380
    %v1397 = vrcp.pop %v1381
    %v1398 = vrcp.pop %v1382
    %v1399 = vrcp.pop %v1383
    %v1400 = vrcp.pop %v1384
    %v1401 = vrcp.pop %v1385
    %v1402 = vld [vmem:[%s900] sm:$0xff]
    %v1403 = vld [vmem:[%s900 + $0x8] sm:$0xff]
    %v1404 = vld [vmem:[%s900 + $0x10] sm:$0xff]
    %v1405 = vld [vmem:[%s900 + $0x18] sm:$0xff]
    %v1406 = vld [vmem:[%s900 + $0x20] sm:$0xff]
    %v1407 = vld [vmem:[%s900 + $0x28] sm:$0xff]
    %v1408 = vld [vmem:[%s900 + $0x30] sm:$0xff]
    %v1409 = vld [vmem:[%s900 + $0x38] sm:$0xff]
    %v1410 = vld [vmem:[%s900 + $0x40] sm:$0xff]
    %v1411 = vld [vmem:[%s900 + $0x48] sm:$0xff]
    %v1412 = vld [vmem:[%s900 + $0x50] sm:$0xff]
    %v1413 = vld [vmem:[%s900 + $0x58] sm:$0xff]
    %v1414 = vld [vmem:[%s900 + $0x60] sm:$0xff]
    %v1415 = vld [vmem:[%s900 + $0x68] sm:$0xff]
    %v1416 = vld [vmem:[%s900 + $0x70] sm:$0xff]
    %v1417 = vld [vmem:[%s900 + $0x78] sm:$0xff]
    %1419 = vset.pattern.permute.xlu0 0
    %1420 = vperm.xlu0 %1419, %v1386
    %v1421 = vpop.permute.xlu0 %1420
    %1424 = vset.pattern.permute.xlu0 0
    %1425 = vperm.xlu0 %1424, %v1387
    %v1426 = vpop.permute.xlu0 %1425
    %1429 = vset.pattern.permute.xlu0 0
    %1430 = vperm.xlu0 %1429, %v1388
    %v1431 = vpop.permute.xlu0 %1430
    %1434 = vset.pattern.permute.xlu0 0
    %1435 = vperm.xlu0 %1434, %v1389
    %v1436 = vpop.permute.xlu0 %1435
    %1439 = vset.pattern.permute.xlu0 0
    %1440 = vperm.xlu0 %1439, %v1390
    %v1441 = vpop.permute.xlu0 %1440
    %1444 = vset.pattern.permute.xlu0 0
    %1445 = vperm.xlu0 %1444, %v1391
    %v1446 = vpop.permute.xlu0 %1445
    %1449 = vset.pattern.permute.xlu0 0
    %1450 = vperm.xlu0 %1449, %v1392
    %v1451 = vpop.permute.xlu0 %1450
    %1454 = vset.pattern.permute.xlu0 0
    %1455 = vperm.xlu0 %1454, %v1393
    %v1456 = vpop.permute.xlu0 %1455
    %1459 = vset.pattern.permute.xlu0 0
    %1460 = vperm.xlu0 %1459, %v1394
    %v1461 = vpop.permute.xlu0 %1460
    %1464 = vset.pattern.permute.xlu0 0
    %1465 = vperm.xlu0 %1464, %v1395
    %v1466 = vpop.permute.xlu0 %1465
    %1469 = vset.pattern.permute.xlu0 0
    %1470 = vperm.xlu0 %1469, %v1396
    %v1471 = vpop.permute.xlu0 %1470
    %1474 = vset.pattern.permute.xlu0 0
    %1475 = vperm.xlu0 %1474, %v1397
    %v1476 = vpop.permute.xlu0 %1475
    %1479 = vset.pattern.permute.xlu0 0
    %1480 = vperm.xlu0 %1479, %v1398
    %v1481 = vpop.permute.xlu0 %1480
    %1484 = vset.pattern.permute.xlu0 0
    %1485 = vperm.xlu0 %1484, %v1399
    %v1486 = vpop.permute.xlu0 %1485
    %1489 = vset.pattern.permute.xlu0 0
    %1490 = vperm.xlu0 %1489, %v1400
    %v1491 = vpop.permute.xlu0 %1490
    %1494 = vset.pattern.permute.xlu0 0
    %1495 = vperm.xlu0 %1494, %v1401
    %v1496 = vpop.permute.xlu0 %1495
    %v1498 = vmul.f32 %v1402, %v1421
    %v1499 = vmul.f32 %v1403, %v1426
    %v1500 = vmul.f32 %v1404, %v1431
    %v1501 = vmul.f32 %v1405, %v1436
    %v1502 = vmul.f32 %v1406, %v1441
    %v1503 = vmul.f32 %v1407, %v1446
    %v1504 = vmul.f32 %v1408, %v1451
    %v1505 = vmul.f32 %v1409, %v1456
    %v1506 = vmul.f32 %v1410, %v1461
    %v1507 = vmul.f32 %v1411, %v1466
    %v1508 = vmul.f32 %v1412, %v1471
    %v1509 = vmul.f32 %v1413, %v1476
    %v1510 = vmul.f32 %v1414, %v1481
    %v1511 = vmul.f32 %v1415, %v1486
    %v1512 = vmul.f32 %v1416, %v1491
    %v1513 = vmul.f32 %v1417, %v1496
    %vm1514 = vcmp.gt.f32.partialorder %v1498, 0.0
    %vm1515 = vcmp.gt.f32.partialorder %v1499, 0.0
    %vm1516 = vcmp.gt.f32.partialorder %v1500, 0.0
    %vm1517 = vcmp.gt.f32.partialorder %v1501, 0.0
    %vm1518 = vcmp.gt.f32.partialorder %v1502, 0.0
    %vm1519 = vcmp.gt.f32.partialorder %v1503, 0.0
    %vm1520 = vcmp.gt.f32.partialorder %v1504, 0.0
    %vm1521 = vcmp.gt.f32.partialorder %v1505, 0.0
    %vm1522 = vcmp.gt.f32.partialorder %v1506, 0.0
    %vm1523 = vcmp.gt.f32.partialorder %v1507, 0.0
    %vm1524 = vcmp.gt.f32.partialorder %v1508, 0.0
    %vm1525 = vcmp.gt.f32.partialorder %v1509, 0.0
    %vm1526 = vcmp.gt.f32.partialorder %v1510, 0.0
    %vm1527 = vcmp.gt.f32.partialorder %v1511, 0.0
    %vm1528 = vcmp.gt.f32.partialorder %v1512, 0.0
    %vm1529 = vcmp.gt.f32.partialorder %v1513, 0.0
    %v1530 = vmul.f32 %v1498, 1.442695
    %v1531 = vpow.pop %v1530
    %v1532 = vmul.f32 %v1499, 1.442695
    %v1533 = vpow.pop %v1532
    %v1534 = vmul.f32 %v1500, 1.442695
    %v1535 = vpow.pop %v1534
    %v1536 = vmul.f32 %v1501, 1.442695
    %v1537 = vpow.pop %v1536
    %v1538 = vmul.f32 %v1502, 1.442695
    %v1539 = vpow.pop %v1538
    %v1540 = vmul.f32 %v1503, 1.442695
    %v1541 = vpow.pop %v1540
    %v1542 = vmul.f32 %v1504, 1.442695
    %v1543 = vpow.pop %v1542
    %v1544 = vmul.f32 %v1505, 1.442695
    %v1545 = vpow.pop %v1544
    %v1546 = vmul.f32 %v1506, 1.442695
    %v1547 = vpow.pop %v1546
    %v1548 = vmul.f32 %v1507, 1.442695
    %v1549 = vpow.pop %v1548
    %v1550 = vmul.f32 %v1508, 1.442695
    %v1551 = vpow.pop %v1550
    %v1552 = vmul.f32 %v1509, 1.442695
    %v1553 = vpow.pop %v1552
    %v1554 = vmul.f32 %v1510, 1.442695
    %v1555 = vpow.pop %v1554
    %v1556 = vmul.f32 %v1511, 1.442695
    %v1557 = vpow.pop %v1556
    %v1558 = vmul.f32 %v1512, 1.442695
    %v1559 = vpow.pop %v1558
    %v1560 = vmul.f32 %v1513, 1.442695
    %v1561 = vpow.pop %v1560
    %v1562 = vsub.f32 %v1531, 1.0
    %v1563 = vsub.f32 %v1533, 1.0
    %v1564 = vsub.f32 %v1535, 1.0
    %v1565 = vsub.f32 %v1537, 1.0
    %v1566 = vsub.f32 %v1539, 1.0
    %v1567 = vsub.f32 %v1541, 1.0
    %v1568 = vsub.f32 %v1543, 1.0
    %v1569 = vsub.f32 %v1545, 1.0
    %v1570 = vsub.f32 %v1547, 1.0
    %v1571 = vsub.f32 %v1549, 1.0
    %v1572 = vsub.f32 %v1551, 1.0
    %v1573 = vsub.f32 %v1553, 1.0
    %v1574 = vsub.f32 %v1555, 1.0
    %v1575 = vsub.f32 %v1557, 1.0
    %v1576 = vsub.f32 %v1559, 1.0
    %v1577 = vsub.f32 %v1561, 1.0
    %v1578 = vsel %vm1514, %v1498, %v1562
    %v1579 = vsel %vm1515, %v1499, %v1563
    %v1580 = vsel %vm1516, %v1500, %v1564
    %v1581 = vsel %vm1517, %v1501, %v1565
    %v1582 = vsel %vm1518, %v1502, %v1566
    %v1583 = vsel %vm1519, %v1503, %v1567
    %v1584 = vsel %vm1520, %v1504, %v1568
    %v1585 = vsel %vm1521, %v1505, %v1569
    %v1586 = vsel %vm1522, %v1506, %v1570
    %v1587 = vsel %vm1523, %v1507, %v1571
    %v1588 = vsel %vm1524, %v1508, %v1572
    %v1589 = vsel %vm1525, %v1509, %v1573
    %v1590 = vsel %vm1526, %v1510, %v1574
    %v1591 = vsel %vm1527, %v1511, %v1575
    %v1592 = vsel %vm1528, %v1512, %v1576
    %v1593 = vsel %vm1529, %v1513, %v1577
    %v1594 = vtanh.pop %v1578
    %v1595 = vtanh.pop %v1579
    %v1596 = vtanh.pop %v1580
    %v1597 = vtanh.pop %v1581
    %v1598 = vtanh.pop %v1582
    %v1599 = vtanh.pop %v1583
    %v1600 = vtanh.pop %v1584
    %v1601 = vtanh.pop %v1585
    %v1602 = vtanh.pop %v1586
    %v1603 = vtanh.pop %v1587
    %v1604 = vtanh.pop %v1588
    %v1605 = vtanh.pop %v1589
    %v1606 = vtanh.pop %v1590
    %v1607 = vtanh.pop %v1591
    %v1608 = vtanh.pop %v1592
    %v1609 = vtanh.pop %v1593
    %s1610 = scalar_lea.vmem %s4, 128
    %1611 = vst.msk [vmem:[%s1610] sm:$0xff] %vm622, %v1594
    %1612 = vst.msk [vmem:[%s1610 + $0x8] sm:$0xff] %vm622, %v1595
    %1613 = vst.msk [vmem:[%s1610 + $0x10] sm:$0xff] %vm622, %v1596
    %1614 = vst.msk [vmem:[%s1610 + $0x18] sm:$0xff] %vm622, %v1597
    %1615 = vst.msk [vmem:[%s1610 + $0x20] sm:$0xff] %vm622, %v1598
    %1616 = vst.msk [vmem:[%s1610 + $0x28] sm:$0xff] %vm622, %v1599
    %1617 = vst.msk [vmem:[%s1610 + $0x30] sm:$0xff] %vm622, %v1600
    %1618 = vst.msk [vmem:[%s1610 + $0x38] sm:$0xff] %vm622, %v1601
    %1619 = vst.msk [vmem:[%s1610 + $0x40] sm:$0xff] %vm622, %v1602
    %1620 = vst.msk [vmem:[%s1610 + $0x48] sm:$0xff] %vm622, %v1603
    %1621 = vst.msk [vmem:[%s1610 + $0x50] sm:$0xff] %vm622, %v1604
    %1622 = vst.msk [vmem:[%s1610 + $0x58] sm:$0xff] %vm622, %v1605
    %1623 = vst.msk [vmem:[%s1610 + $0x60] sm:$0xff] %vm622, %v1606
    %1624 = vst.msk [vmem:[%s1610 + $0x68] sm:$0xff] %vm622, %v1607
    %1625 = vst.msk [vmem:[%s1610 + $0x70] sm:$0xff] %vm622, %v1608
    %1626 = vst.msk [vmem:[%s1610 + $0x78] sm:$0xff] %vm622, %v1609
  $region25: #{_spgat_forward.2} parent=0 // pred_fallthru
    _
  // Predicated region
  $region26: #{_spgat_forward.2} parent=0 // pred_check
    _
  $region27: #{_spgat_forward.2} parent=0 // pred_check_branch
    %1628 = sbr.rel (0) target = $region29
  $region28: #{_spgat_forward.2} parent=0 // pred_region
    _
  $region29: #{_spgat_forward.2} parent=0 // pred_fallthru
    _
  // Predicated region
  $region30: #{_spgat_forward.2} parent=0 // pred_check
    _
  $region31: #{_spgat_forward.2} parent=0 // pred_check_branch
    %1630 = sbr.rel (0) target = $region33
  $region32: #{_spgat_forward.2} parent=0 // pred_region
    _
  $region33: #{_spgat_forward.2} parent=0 // pred_fallthru
    _

// kernel: _spgat_forward.3
$region0: #{_spgat_forward.3}
  #allocation0 [shape = 'u32[]', space=smem, size = 0x4, offset = 0x4, fixed_abs, tag = 'smem constant byte address 0x4 - core index']
  #allocation1 [shape = 'u32[144,128]{1,0:T(1,128)}', space=vmem, size = 0x12000, scoped, tag = 'internal scratch']
  #allocation2 [shape = 'f32[1,128,4]{2,1,0:T(8,128)}', space=vmem, size = 0x10000, scoped, tag = 'scratch operand']
  #allocation3 [shape = 'f32[1,128,1]{2,1,0:T(8,128)}', space=vmem, size = 0x10000, scoped, tag = 'scratch operand']
  %s0 = inlined_call_operand.vmem [shape: f32[128,1], index: 0, kind: input, shape index: {}]
  %s1 = inlined_call_operand.vmem [shape: f32[1,128], index: 1, kind: input, shape index: {}]
  %s2 = inlined_call_operand.vmem [shape: f32[1,128,4], index: 2, kind: input, shape index: {}]
  %s3 = inlined_call_operand.vmem [shape: s8[128,128], index: 3, kind: input, shape index: {}]
  %s4 = inlined_call_operand.vmem [shape: f32[1,128,4], index: 4, kind: output, shape index: {}]
  %s5 = sld [smem:[#allocation0]]
  $region34: #{_spgat_forward.3} parent=0
    _
  %s7 = ssub.s32 1, %s5
  %s8 = scalar_select 0, %s7, %s5
  // Predicated region
  $region2: #{_spgat_forward.3} parent=0 // pred_check
    _
  $region3: #{_spgat_forward.3} parent=0 // pred_check_branch
    %10 = sbr.rel (0) target = $region5
  $region4: #{_spgat_forward.3} parent=0 // pred_region
    _
  $region5: #{_spgat_forward.3} parent=0 // pred_fallthru
    _
  // Predicated region
  $region6: #{_spgat_forward.3} parent=0 // pred_check
    _
  $region7: #{_spgat_forward.3} parent=0 // pred_check_branch
    %12 = sbr.rel (0) target = $region9
  $region8: #{_spgat_forward.3} parent=0 // pred_region
    _
  $region9: #{_spgat_forward.3} parent=0 // pred_fallthru
    _
  // Predicated region
  $region10: #{_spgat_forward.3} parent=0 // pred_check
    _
  $region11: #{_spgat_forward.3} parent=0 // pred_check_branch
    %14 = sbr.rel (0) target = $region13
  $region12: #{_spgat_forward.3} parent=0 // pred_region
    _
  $region13: #{_spgat_forward.3} parent=0 // pred_fallthru
    _
  // Predicated region
  $region14: #{_spgat_forward.3} parent=0 // pred_check
    _
  $region15: #{_spgat_forward.3} parent=0 // pred_check_branch
    %16 = sbr.rel (0) target = $region17
  $region16: #{_spgat_forward.3} parent=0 // pred_region
    _
  $region17: #{_spgat_forward.3} parent=0 // pred_fallthru
    _
  %p17 = scmp.eq.s32.totalorder 0, 0
  // Predicated region
  $region18: #{_spgat_forward.3} parent=0 // pred_check
    %p18 = pneg %p17
  $region19: #{_spgat_forward.3} parent=0 // pred_check_branch
    %20 = sbr.rel (%p18) target = $region21
  $region20: #{_spgat_forward.3} parent=0 // pred_region
    %vm21 = vcmask 31744
    %22 = vst.msk [vmem:[#allocation2] sm:$0xff] %vm21, 0.0
    %23 = vst.msk [vmem:[#allocation2 + $0x8] sm:$0xff] %vm21, 0.0
    %24 = vst.msk [vmem:[#allocation2 + $0x10] sm:$0xff] %vm21, 0.0
    %25 = vst.msk [vmem:[#allocation2 + $0x18] sm:$0xff] %vm21, 0.0
    %26 = vst.msk [vmem:[#allocation2 + $0x20] sm:$0xff] %vm21, 0.0
    %27 = vst.msk [vmem:[#allocation2 + $0x28] sm:$0xff] %vm21, 0.0
    %28 = vst.msk [vmem:[#allocation2 + $0x30] sm:$0xff] %vm21, 0.0
    %29 = vst.msk [vmem:[#allocation2 + $0x38] sm:$0xff] %vm21, 0.0
    %30 = vst.msk [vmem:[#allocation2 + $0x40] sm:$0xff] %vm21, 0.0
    %31 = vst.msk [vmem:[#allocation2 + $0x48] sm:$0xff] %vm21, 0.0
    %32 = vst.msk [vmem:[#allocation2 + $0x50] sm:$0xff] %vm21, 0.0
    %33 = vst.msk [vmem:[#allocation2 + $0x58] sm:$0xff] %vm21, 0.0
    %34 = vst.msk [vmem:[#allocation2 + $0x60] sm:$0xff] %vm21, 0.0
    %35 = vst.msk [vmem:[#allocation2 + $0x68] sm:$0xff] %vm21, 0.0
    %36 = vst.msk [vmem:[#allocation2 + $0x70] sm:$0xff] %vm21, 0.0
    %37 = vst.msk [vmem:[#allocation2 + $0x78] sm:$0xff] %vm21, 0.0
    %vm38 = vcmask 7168
    %39 = vst.msk [vmem:[#allocation3] sm:$0xff] %vm38, 0.0
    %40 = vst.msk [vmem:[#allocation3 + $0x8] sm:$0xff] %vm38, 0.0
    %41 = vst.msk [vmem:[#allocation3 + $0x10] sm:$0xff] %vm38, 0.0
    %42 = vst.msk [vmem:[#allocation3 + $0x18] sm:$0xff] %vm38, 0.0
    %43 = vst.msk [vmem:[#allocation3 + $0x20] sm:$0xff] %vm38, 0.0
    %44 = vst.msk [vmem:[#allocation3 + $0x28] sm:$0xff] %vm38, 0.0
    %45 = vst.msk [vmem:[#allocation3 + $0x30] sm:$0xff] %vm38, 0.0
    %46 = vst.msk [vmem:[#allocation3 + $0x38] sm:$0xff] %vm38, 0.0
    %47 = vst.msk [vmem:[#allocation3 + $0x40] sm:$0xff] %vm38, 0.0
    %48 = vst.msk [vmem:[#allocation3 + $0x48] sm:$0xff] %vm38, 0.0
    %49 = vst.msk [vmem:[#allocation3 + $0x50] sm:$0xff] %vm38, 0.0
    %50 = vst.msk [vmem:[#allocation3 + $0x58] sm:$0xff] %vm38, 0.0
    %51 = vst.msk [vmem:[#allocation3 + $0x60] sm:$0xff] %vm38, 0.0
    %52 = vst.msk [vmem:[#allocation3 + $0x68] sm:$0xff] %vm38, 0.0
    %53 = vst.msk [vmem:[#allocation3 + $0x70] sm:$0xff] %vm38, 0.0
    %54 = vst.msk [vmem:[#allocation3 + $0x78] sm:$0xff] %vm38, 0.0
  $region21: #{_spgat_forward.3} parent=0 // pred_fallthru
    _
  %v55 = vld [vmem:[%s3] sm:$0x3]
  %v56 = vld [vmem:[%s3 + $0x2] sm:$0x3]
  %v57 = vld [vmem:[%s3 + $0x4] sm:$0x3]
  %v58 = vld [vmem:[%s3 + $0x6] sm:$0x3]
  %v59 = vld [vmem:[%s3 + $0x8] sm:$0x3]
  %v60 = vld [vmem:[%s3 + $0xa] sm:$0x3]
  %v61 = vld [vmem:[%s3 + $0xc] sm:$0x3]
  %v62 = vld [vmem:[%s3 + $0xe] sm:$0x3]
  %v63 = vld [vmem:[%s3 + $0x10] sm:$0x3]
  %v64 = vld [vmem:[%s3 + $0x12] sm:$0x3]
  %v65 = vld [vmem:[%s3 + $0x14] sm:$0x3]
  %v66 = vld [vmem:[%s3 + $0x16] sm:$0x3]
  %v67 = vld [vmem:[%s3 + $0x18] sm:$0x3]
  %v68 = vld [vmem:[%s3 + $0x1a] sm:$0x3]
  %v69 = vld [vmem:[%s3 + $0x1c] sm:$0x3]
  %v70 = vld [vmem:[%s3 + $0x1e] sm:$0x3]
  %v71 = vunpack.c.0.s8 %v55
  %v72 = vunpack.c.0.s8 %v56
  %v73 = vunpack.c.0.s8 %v57
  %v74 = vunpack.c.0.s8 %v58
  %v75 = vunpack.c.0.s8 %v59
  %v76 = vunpack.c.0.s8 %v60
  %v77 = vunpack.c.0.s8 %v61
  %v78 = vunpack.c.0.s8 %v62
  %v79 = vunpack.c.0.s8 %v63
  %v80 = vunpack.c.0.s8 %v64
  %v81 = vunpack.c.0.s8 %v65
  %v82 = vunpack.c.0.s8 %v66
  %v83 = vunpack.c.0.s8 %v67
  %v84 = vunpack.c.0.s8 %v68
  %v85 = vunpack.c.0.s8 %v69
  %v86 = vunpack.c.0.s8 %v70
  %v87 = vcvt.s32.f32 %v71
  %v88 = vcvt.s32.f32 %v72
  %v89 = vcvt.s32.f32 %v73
  %v90 = vcvt.s32.f32 %v74
  %v91 = vcvt.s32.f32 %v75
  %v92 = vcvt.s32.f32 %v76
  %v93 = vcvt.s32.f32 %v77
  %v94 = vcvt.s32.f32 %v78
  %v95 = vcvt.s32.f32 %v79
  %v96 = vcvt.s32.f32 %v80
  %v97 = vcvt.s32.f32 %v81
  %v98 = vcvt.s32.f32 %v82
  %v99 = vcvt.s32.f32 %v83
  %v100 = vcvt.s32.f32 %v84
  %v101 = vcvt.s32.f32 %v85
  %v102 = vcvt.s32.f32 %v86
  %v103 = vld [vmem:[%s0] sm:$0xff]
  %v104 = vld [vmem:[%s0 + $0x8] sm:$0xff]
  %v105 = vld [vmem:[%s0 + $0x10] sm:$0xff]
  %v106 = vld [vmem:[%s0 + $0x18] sm:$0xff]
  %v107 = vld [vmem:[%s0 + $0x20] sm:$0xff]
  %v108 = vld [vmem:[%s0 + $0x28] sm:$0xff]
  %v109 = vld [vmem:[%s0 + $0x30] sm:$0xff]
  %v110 = vld [vmem:[%s0 + $0x38] sm:$0xff]
  %v111 = vld [vmem:[%s0 + $0x40] sm:$0xff]
  %v112 = vld [vmem:[%s0 + $0x48] sm:$0xff]
  %v113 = vld [vmem:[%s0 + $0x50] sm:$0xff]
  %v114 = vld [vmem:[%s0 + $0x58] sm:$0xff]
  %v115 = vld [vmem:[%s0 + $0x60] sm:$0xff]
  %v116 = vld [vmem:[%s0 + $0x68] sm:$0xff]
  %v117 = vld [vmem:[%s0 + $0x70] sm:$0xff]
  %v118 = vld [vmem:[%s0 + $0x78] sm:$0xff]
  %v119 = vld [vmem:[%s1] sm:$0x1]
  %121 = vset.pattern.permute.xlu0 0
  %122 = vperm.xlu0 %121, %v103
  %v123 = vpop.permute.xlu0 %122
  %126 = vset.pattern.permute.xlu0 0
  %127 = vperm.xlu0 %126, %v104
  %v128 = vpop.permute.xlu0 %127
  %131 = vset.pattern.permute.xlu0 0
  %132 = vperm.xlu0 %131, %v105
  %v133 = vpop.permute.xlu0 %132
  %136 = vset.pattern.permute.xlu0 0
  %137 = vperm.xlu0 %136, %v106
  %v138 = vpop.permute.xlu0 %137
  %141 = vset.pattern.permute.xlu0 0
  %142 = vperm.xlu0 %141, %v107
  %v143 = vpop.permute.xlu0 %142
  %146 = vset.pattern.permute.xlu0 0
  %147 = vperm.xlu0 %146, %v108
  %v148 = vpop.permute.xlu0 %147
  %151 = vset.pattern.permute.xlu0 0
  %152 = vperm.xlu0 %151, %v109
  %v153 = vpop.permute.xlu0 %152
  %156 = vset.pattern.permute.xlu0 0
  %157 = vperm.xlu0 %156, %v110
  %v158 = vpop.permute.xlu0 %157
  %161 = vset.pattern.permute.xlu0 0
  %162 = vperm.xlu0 %161, %v111
  %v163 = vpop.permute.xlu0 %162
  %166 = vset.pattern.permute.xlu0 0
  %167 = vperm.xlu0 %166, %v112
  %v168 = vpop.permute.xlu0 %167
  %171 = vset.pattern.permute.xlu0 0
  %172 = vperm.xlu0 %171, %v113
  %v173 = vpop.permute.xlu0 %172
  %176 = vset.pattern.permute.xlu0 0
  %177 = vperm.xlu0 %176, %v114
  %v178 = vpop.permute.xlu0 %177
  %181 = vset.pattern.permute.xlu0 0
  %182 = vperm.xlu0 %181, %v115
  %v183 = vpop.permute.xlu0 %182
  %186 = vset.pattern.permute.xlu0 0
  %187 = vperm.xlu0 %186, %v116
  %v188 = vpop.permute.xlu0 %187
  %191 = vset.pattern.permute.xlu0 0
  %192 = vperm.xlu0 %191, %v117
  %v193 = vpop.permute.xlu0 %192
  %196 = vset.pattern.permute.xlu0 0
  %197 = vperm.xlu0 %196, %v118
  %v198 = vpop.permute.xlu0 %197
  %v201 = vlaneseq
  %v202 = vshrl.u32 %v201, 7
  %v203 = vsub.s32 0, %v202
  %v204 = vrot.slane %v119, %v203
  %v206 = vadd.f32 %v123, %v204
  %v207 = vadd.f32 %v128, %v204
  %v208 = vadd.f32 %v133, %v204
  %v209 = vadd.f32 %v138, %v204
  %v210 = vadd.f32 %v143, %v204
  %v211 = vadd.f32 %v148, %v204
  %v212 = vadd.f32 %v153, %v204
  %v213 = vadd.f32 %v158, %v204
  %v214 = vadd.f32 %v163, %v204
  %v215 = vadd.f32 %v168, %v204
  %v216 = vadd.f32 %v173, %v204
  %v217 = vadd.f32 %v178, %v204
  %v218 = vadd.f32 %v183, %v204
  %v219 = vadd.f32 %v188, %v204
  %v220 = vadd.f32 %v193, %v204
  %v221 = vadd.f32 %v198, %v204
  %v222 = vmul.f32 %v206, 0.2
  %v223 = vmul.f32 %v207, 0.2
  %v224 = vmul.f32 %v208, 0.2
  %v225 = vmul.f32 %v209, 0.2
  %v226 = vmul.f32 %v210, 0.2
  %v227 = vmul.f32 %v211, 0.2
  %v228 = vmul.f32 %v212, 0.2
  %v229 = vmul.f32 %v213, 0.2
  %v230 = vmul.f32 %v214, 0.2
  %v231 = vmul.f32 %v215, 0.2
  %v232 = vmul.f32 %v216, 0.2
  %v233 = vmul.f32 %v217, 0.2
  %v234 = vmul.f32 %v218, 0.2
  %v235 = vmul.f32 %v219, 0.2
  %v236 = vmul.f32 %v220, 0.2
  %v237 = vmul.f32 %v221, 0.2
  %v238 = vmax.f32 %v206, %v222
  %v239 = vmax.f32 %v207, %v223
  %v240 = vmax.f32 %v208, %v224
  %v241 = vmax.f32 %v209, %v225
  %v242 = vmax.f32 %v210, %v226
  %v243 = vmax.f32 %v211, %v227
  %v244 = vmax.f32 %v212, %v228
  %v245 = vmax.f32 %v213, %v229
  %v246 = vmax.f32 %v214, %v230
  %v247 = vmax.f32 %v215, %v231
  %v248 = vmax.f32 %v216, %v232
  %v249 = vmax.f32 %v217, %v233
  %v250 = vmax.f32 %v218, %v234
  %v251 = vmax.f32 %v219, %v235
  %v252 = vmax.f32 %v220, %v236
  %v253 = vmax.f32 %v221, %v237
  %v254 = vsub.f32 0.0, %v238
  %v255 = vsub.f32 0.0, %v239
  %v256 = vsub.f32 0.0, %v240
  %v257 = vsub.f32 0.0, %v241
  %v258 = vsub.f32 0.0, %v242
  %v259 = vsub.f32 0.0, %v243
  %v260 = vsub.f32 0.0, %v244
  %v261 = vsub.f32 0.0, %v245
  %v262 = vsub.f32 0.0, %v246
  %v263 = vsub.f32 0.0, %v247
  %v264 = vsub.f32 0.0, %v248
  %v265 = vsub.f32 0.0, %v249
  %v266 = vsub.f32 0.0, %v250
  %v267 = vsub.f32 0.0, %v251
  %v268 = vsub.f32 0.0, %v252
  %v269 = vsub.f32 0.0, %v253
  %v270 = vmul.f32 %v254, 1.442695
  %v271 = vpow.pop %v270
  %v272 = vmul.f32 %v255, 1.442695
  %v273 = vpow.pop %v272
  %v274 = vmul.f32 %v256, 1.442695
  %v275 = vpow.pop %v274
  %v276 = vmul.f32 %v257, 1.442695
  %v277 = vpow.pop %v276
  %v278 = vmul.f32 %v258, 1.442695
  %v279 = vpow.pop %v278
  %v280 = vmul.f32 %v259, 1.442695
  %v281 = vpow.pop %v280
  %v282 = vmul.f32 %v260, 1.442695
  %v283 = vpow.pop %v282
  %v284 = vmul.f32 %v261, 1.442695
  %v285 = vpow.pop %v284
  %v286 = vmul.f32 %v262, 1.442695
  %v287 = vpow.pop %v286
  %v288 = vmul.f32 %v263, 1.442695
  %v289 = vpow.pop %v288
  %v290 = vmul.f32 %v264, 1.442695
  %v291 = vpow.pop %v290
  %v292 = vmul.f32 %v265, 1.442695
  %v293 = vpow.pop %v292
  %v294 = vmul.f32 %v266, 1.442695
  %v295 = vpow.pop %v294
  %v296 = vmul.f32 %v267, 1.442695
  %v297 = vpow.pop %v296
  %v298 = vmul.f32 %v268, 1.442695
  %v299 = vpow.pop %v298
  %v300 = vmul.f32 %v269, 1.442695
  %v301 = vpow.pop %v300
  %v302 = vmul.f32 %v271, %v87
  %v303 = vmul.f32 %v273, %v88
  %v304 = vmul.f32 %v275, %v89
  %v305 = vmul.f32 %v277, %v90
  %v306 = vmul.f32 %v279, %v91
  %v307 = vmul.f32 %v281, %v92
  %v308 = vmul.f32 %v283, %v93
  %v309 = vmul.f32 %v285, %v94
  %v310 = vmul.f32 %v287, %v95
  %v311 = vmul.f32 %v289, %v96
  %v312 = vmul.f32 %v291, %v97
  %v313 = vmul.f32 %v293, %v98
  %v314 = vmul.f32 %v295, %v99
  %v315 = vmul.f32 %v297, %v100
  %v316 = vmul.f32 %v299, %v101
  %v317 = vmul.f32 %v301, %v102
  %v318 = vld [vmem:[#allocation3] sm:$0xff]
  %v319 = vld [vmem:[#allocation3 + $0x8] sm:$0xff]
  %v320 = vld [vmem:[#allocation3 + $0x10] sm:$0xff]
  %v321 = vld [vmem:[#allocation3 + $0x18] sm:$0xff]
  %v322 = vld [vmem:[#allocation3 + $0x20] sm:$0xff]
  %v323 = vld [vmem:[#allocation3 + $0x28] sm:$0xff]
  %v324 = vld [vmem:[#allocation3 + $0x30] sm:$0xff]
  %v325 = vld [vmem:[#allocation3 + $0x38] sm:$0xff]
  %v326 = vld [vmem:[#allocation3 + $0x40] sm:$0xff]
  %v327 = vld [vmem:[#allocation3 + $0x48] sm:$0xff]
  %v328 = vld [vmem:[#allocation3 + $0x50] sm:$0xff]
  %v329 = vld [vmem:[#allocation3 + $0x58] sm:$0xff]
  %v330 = vld [vmem:[#allocation3 + $0x60] sm:$0xff]
  %v331 = vld [vmem:[#allocation3 + $0x68] sm:$0xff]
  %v332 = vld [vmem:[#allocation3 + $0x70] sm:$0xff]
  %v333 = vld [vmem:[#allocation3 + $0x78] sm:$0xff]
  %334 = vadd.xlane.f32.xlu0 %v302
  %v335 = vpop.xlane.xlu0 %334
  %336 = vadd.xlane.f32.xlu0 %v303
  %v337 = vpop.xlane.xlu0 %336
  %338 = vadd.xlane.f32.xlu0 %v304
  %v339 = vpop.xlane.xlu0 %338
  %340 = vadd.xlane.f32.xlu0 %v305
  %v341 = vpop.xlane.xlu0 %340
  %342 = vadd.xlane.f32.xlu0 %v306
  %v343 = vpop.xlane.xlu0 %342
  %344 = vadd.xlane.f32.xlu0 %v307
  %v345 = vpop.xlane.xlu0 %344
  %346 = vadd.xlane.f32.xlu0 %v308
  %v347 = vpop.xlane.xlu0 %346
  %348 = vadd.xlane.f32.xlu0 %v309
  %v349 = vpop.xlane.xlu0 %348
  %350 = vadd.xlane.f32.xlu0 %v310
  %v351 = vpop.xlane.xlu0 %350
  %352 = vadd.xlane.f32.xlu0 %v311
  %v353 = vpop.xlane.xlu0 %352
  %354 = vadd.xlane.f32.xlu0 %v312
  %v355 = vpop.xlane.xlu0 %354
  %356 = vadd.xlane.f32.xlu0 %v313
  %v357 = vpop.xlane.xlu0 %356
  %358 = vadd.xlane.f32.xlu0 %v314
  %v359 = vpop.xlane.xlu0 %358
  %360 = vadd.xlane.f32.xlu0 %v315
  %v361 = vpop.xlane.xlu0 %360
  %362 = vadd.xlane.f32.xlu0 %v316
  %v363 = vpop.xlane.xlu0 %362
  %364 = vadd.xlane.f32.xlu0 %v317
  %v365 = vpop.xlane.xlu0 %364
  %v366 = vadd.f32 %v318, %v335
  %v367 = vadd.f32 %v319, %v337
  %v368 = vadd.f32 %v320, %v339
  %v369 = vadd.f32 %v321, %v341
  %v370 = vadd.f32 %v322, %v343
  %v371 = vadd.f32 %v323, %v345
  %v372 = vadd.f32 %v324, %v347
  %v373 = vadd.f32 %v325, %v349
  %v374 = vadd.f32 %v326, %v351
  %v375 = vadd.f32 %v327, %v353
  %v376 = vadd.f32 %v328, %v355
  %v377 = vadd.f32 %v329, %v357
  %v378 = vadd.f32 %v330, %v359
  %v379 = vadd.f32 %v331, %v361
  %v380 = vadd.f32 %v332, %v363
  %v381 = vadd.f32 %v333, %v365
  %vm382 = vcmask 7168
  %383 = vst.msk [vmem:[#allocation3] sm:$0xff] %vm382, %v366
  %384 = vst.msk [vmem:[#allocation3 + $0x8] sm:$0xff] %vm382, %v367
  %385 = vst.msk [vmem:[#allocation3 + $0x10] sm:$0xff] %vm382, %v368
  %386 = vst.msk [vmem:[#allocation3 + $0x18] sm:$0xff] %vm382, %v369
  %387 = vst.msk [vmem:[#allocation3 + $0x20] sm:$0xff] %vm382, %v370
  %388 = vst.msk [vmem:[#allocation3 + $0x28] sm:$0xff] %vm382, %v371
  %389 = vst.msk [vmem:[#allocation3 + $0x30] sm:$0xff] %vm382, %v372
  %390 = vst.msk [vmem:[#allocation3 + $0x38] sm:$0xff] %vm382, %v373
  %391 = vst.msk [vmem:[#allocation3 + $0x40] sm:$0xff] %vm382, %v374
  %392 = vst.msk [vmem:[#allocation3 + $0x48] sm:$0xff] %vm382, %v375
  %393 = vst.msk [vmem:[#allocation3 + $0x50] sm:$0xff] %vm382, %v376
  %394 = vst.msk [vmem:[#allocation3 + $0x58] sm:$0xff] %vm382, %v377
  %395 = vst.msk [vmem:[#allocation3 + $0x60] sm:$0xff] %vm382, %v378
  %396 = vst.msk [vmem:[#allocation3 + $0x68] sm:$0xff] %vm382, %v379
  %397 = vst.msk [vmem:[#allocation3 + $0x70] sm:$0xff] %vm382, %v380
  %398 = vst.msk [vmem:[#allocation3 + $0x78] sm:$0xff] %vm382, %v381
  %v399 = vld [vmem:[#allocation2] sm:$0xff]
  %v400 = vld [vmem:[#allocation2 + $0x8] sm:$0xff]
  %v401 = vld [vmem:[#allocation2 + $0x10] sm:$0xff]
  %v402 = vld [vmem:[#allocation2 + $0x18] sm:$0xff]
  %v403 = vld [vmem:[#allocation2 + $0x20] sm:$0xff]
  %v404 = vld [vmem:[#allocation2 + $0x28] sm:$0xff]
  %v405 = vld [vmem:[#allocation2 + $0x30] sm:$0xff]
  %v406 = vld [vmem:[#allocation2 + $0x38] sm:$0xff]
  %v407 = vld [vmem:[#allocation2 + $0x40] sm:$0xff]
  %v408 = vld [vmem:[#allocation2 + $0x48] sm:$0xff]
  %v409 = vld [vmem:[#allocation2 + $0x50] sm:$0xff]
  %v410 = vld [vmem:[#allocation2 + $0x58] sm:$0xff]
  %v411 = vld [vmem:[#allocation2 + $0x60] sm:$0xff]
  %v412 = vld [vmem:[#allocation2 + $0x68] sm:$0xff]
  %v413 = vld [vmem:[#allocation2 + $0x70] sm:$0xff]
  %v414 = vld [vmem:[#allocation2 + $0x78] sm:$0xff]
  %v415 = vld [vmem:[%s2] sm:$0xff]
  %v416 = vld [vmem:[%s2 + $0x8] sm:$0xff]
  %v417 = vld [vmem:[%s2 + $0x10] sm:$0xff]
  %v418 = vld [vmem:[%s2 + $0x18] sm:$0xff]
  %v419 = vld [vmem:[%s2 + $0x20] sm:$0xff]
  %v420 = vld [vmem:[%s2 + $0x28] sm:$0xff]
  %v421 = vld [vmem:[%s2 + $0x30] sm:$0xff]
  %v422 = vld [vmem:[%s2 + $0x38] sm:$0xff]
  %v423 = vld [vmem:[%s2 + $0x40] sm:$0xff]
  %v424 = vld [vmem:[%s2 + $0x48] sm:$0xff]
  %v425 = vld [vmem:[%s2 + $0x50] sm:$0xff]
  %v426 = vld [vmem:[%s2 + $0x58] sm:$0xff]
  %v427 = vld [vmem:[%s2 + $0x60] sm:$0xff]
  %v428 = vld [vmem:[%s2 + $0x68] sm:$0xff]
  %v429 = vld [vmem:[%s2 + $0x70] sm:$0xff]
  %v430 = vld [vmem:[%s2 + $0x78] sm:$0xff]
  %431 = vmatprep.subr.mxu0 0.0
  %432 = vmatpush1.msra.mxu0 %v415
  %433 = vmatprep.subr.mxu0 0.0
  %434 = vmatpush1.msra.mxu0 %v416
  %435 = vmatprep.subr.mxu0 0.0
  %436 = vmatpush1.msra.mxu0 %v417
  %437 = vmatprep.subr.mxu0 0.0
  %438 = vmatpush1.msra.mxu0 %v418
  %439 = vmatprep.subr.mxu0 0.0
  %440 = vmatpush1.msra.mxu0 %v419
  %441 = vmatprep.subr.mxu0 0.0
  %442 = vmatpush1.msra.mxu0 %v420
  %443 = vmatprep.subr.mxu0 0.0
  %444 = vmatpush1.msra.mxu0 %v421
  %445 = vmatprep.subr.mxu0 0.0
  %446 = vmatpush1.msra.mxu0 %v422
  %447 = vmatprep.subr.mxu0 0.0
  %448 = vmatpush1.msra.mxu0 %v423
  %449 = vmatprep.subr.mxu0 0.0
  %450 = vmatpush1.msra.mxu0 %v424
  %451 = vmatprep.subr.mxu0 0.0
  %452 = vmatpush1.msra.mxu0 %v425
  %453 = vmatprep.subr.mxu0 0.0
  %454 = vmatpush1.msra.mxu0 %v426
  %455 = vmatprep.subr.mxu0 0.0
  %456 = vmatpush1.msra.mxu0 %v427
  %457 = vmatprep.subr.mxu0 0.0
  %458 = vmatpush1.msra.mxu0 %v428
  %459 = vmatprep.subr.mxu0 0.0
  %460 = vmatpush1.msra.mxu0 %v429
  %461 = vmatprep.subr.mxu0 0.0
  %462 = vmatpush1.msra.mxu0 %v430
  %463 = vmatprep.subr.mxu0 0.0
  %464 = vmatpush1.msra.mxu0 0.0
  %465 = vmatprep.subr.mxu0 0.0
  %466 = vmatpush1.msra.mxu0 0.0
  %467 = vmatprep.subr.mxu0 0.0
  %468 = vmatpush1.msra.mxu0 0.0
  %469 = vmatprep.subr.mxu0 0.0
  %470 = vmatpush1.msra.mxu0 0.0
  %471 = vmatprep.subr.mxu0 0.0
  %472 = vmatpush1.msra.mxu0 0.0
  %473 = vmatprep.subr.mxu0 0.0
  %474 = vmatpush1.msra.mxu0 0.0
  %475 = vmatprep.subr.mxu0 0.0
  %476 = vmatpush1.msra.mxu0 0.0
  %477 = vmatprep.subr.mxu0 0.0
  %478 = vmatpush1.msra.mxu0 0.0
  %479 = vmatprep.subr.mxu0 0.0
  %480 = vmatpush1.msra.mxu0 0.0
  %481 = vmatprep.subr.mxu0 0.0
  %482 = vmatpush1.msra.mxu0 0.0
  %483 = vmatprep.subr.mxu0 0.0
  %484 = vmatpush1.msra.mxu0 0.0
  %485 = vmatprep.subr.mxu0 0.0
  %486 = vmatpush1.msra.mxu0 0.0
  %487 = vmatprep.subr.mxu0 0.0
  %488 = vmatpush1.msra.mxu0 0.0
  %489 = vmatprep.subr.mxu0 0.0
  %490 = vmatpush1.msra.mxu0 0.0
  %491 = vmatprep.subr.mxu0 0.0
  %492 = vmatpush1.msra.mxu0 0.0
  %493 = vmatprep.subr.mxu0 0.0
  %494 = vmatpush1.msra.mxu0 0.0
  %495 = vmatprep.mubr.f32.mxu0 0.0
  %496 = vmatmul.mubr.f32.gmra.mrb[0].mxu0 %v302
  %v497 = vpop.f32.mrb[0].mxu0
  %v498 = vadd.f32 0.0, %v497
  %v499 = vpop.f32.mrb[0].mxu0
  %500 = vmatprep.mubr.f32.mxu0 0.0
  %501 = vmatmul.mubr.f32.gmra.mrb[0].mxu0 %v303
  %v502 = vpop.f32.mrb[0].mxu0
  %v503 = vadd.f32 0.0, %v502
  %v504 = vpop.f32.mrb[0].mxu0
  %505 = vmatprep.mubr.f32.mxu0 0.0
  %506 = vmatmul.mubr.f32.gmra.mrb[0].mxu0 %v304
  %v507 = vpop.f32.mrb[0].mxu0
  %v508 = vadd.f32 0.0, %v507
  %v509 = vpop.f32.mrb[0].mxu0
  %510 = vmatprep.mubr.f32.mxu0 0.0
  %511 = vmatmul.mubr.f32.gmra.mrb[0].mxu0 %v305
  %v512 = vpop.f32.mrb[0].mxu0
  %v513 = vadd.f32 0.0, %v512
  %v514 = vpop.f32.mrb[0].mxu0
  %515 = vmatprep.mubr.f32.mxu0 0.0
  %516 = vmatmul.mubr.f32.gmra.mrb[0].mxu0 %v306
  %v517 = vpop.f32.mrb[0].mxu0
  %v518 = vadd.f32 0.0, %v517
  %v519 = vpop.f32.mrb[0].mxu0
  %520 = vmatprep.mubr.f32.mxu0 0.0
  %521 = vmatmul.mubr.f32.gmra.mrb[0].mxu0 %v307
  %v522 = vpop.f32.mrb[0].mxu0
  %v523 = vadd.f32 0.0, %v522
  %v524 = vpop.f32.mrb[0].mxu0
  %525 = vmatprep.mubr.f32.mxu0 0.0
  %526 = vmatmul.mubr.f32.gmra.mrb[0].mxu0 %v308
  %v527 = vpop.f32.mrb[0].mxu0
  %v528 = vadd.f32 0.0, %v527
  %v529 = vpop.f32.mrb[0].mxu0
  %530 = vmatprep.mubr.f32.mxu0 0.0
  %531 = vmatmul.mubr.f32.gmra.mrb[0].mxu0 %v309
  %v532 = vpop.f32.mrb[0].mxu0
  %v533 = vadd.f32 0.0, %v532
  %v534 = vpop.f32.mrb[0].mxu0
  %535 = vmatprep.mubr.f32.mxu0 0.0
  %536 = vmatmul.mubr.f32.gmra.mrb[0].mxu0 %v310
  %v537 = vpop.f32.mrb[0].mxu0
  %v538 = vadd.f32 0.0, %v537
  %v539 = vpop.f32.mrb[0].mxu0
  %540 = vmatprep.mubr.f32.mxu0 0.0
  %541 = vmatmul.mubr.f32.gmra.mrb[0].mxu0 %v311
  %v542 = vpop.f32.mrb[0].mxu0
  %v543 = vadd.f32 0.0, %v542
  %v544 = vpop.f32.mrb[0].mxu0
  %545 = vmatprep.mubr.f32.mxu0 0.0
  %546 = vmatmul.mubr.f32.gmra.mrb[0].mxu0 %v312
  %v547 = vpop.f32.mrb[0].mxu0
  %v548 = vadd.f32 0.0, %v547
  %v549 = vpop.f32.mrb[0].mxu0
  %550 = vmatprep.mubr.f32.mxu0 0.0
  %551 = vmatmul.mubr.f32.gmra.mrb[0].mxu0 %v313
  %v552 = vpop.f32.mrb[0].mxu0
  %v553 = vadd.f32 0.0, %v552
  %v554 = vpop.f32.mrb[0].mxu0
  %555 = vmatprep.mubr.f32.mxu0 0.0
  %556 = vmatmul.mubr.f32.gmra.mrb[0].mxu0 %v314
  %v557 = vpop.f32.mrb[0].mxu0
  %v558 = vadd.f32 0.0, %v557
  %v559 = vpop.f32.mrb[0].mxu0
  %560 = vmatprep.mubr.f32.mxu0 0.0
  %561 = vmatmul.mubr.f32.gmra.mrb[0].mxu0 %v315
  %v562 = vpop.f32.mrb[0].mxu0
  %v563 = vadd.f32 0.0, %v562
  %v564 = vpop.f32.mrb[0].mxu0
  %565 = vmatprep.mubr.f32.mxu0 0.0
  %566 = vmatmul.mubr.f32.gmra.mrb[0].mxu0 %v316
  %v567 = vpop.f32.mrb[0].mxu0
  %v568 = vadd.f32 0.0, %v567
  %v569 = vpop.f32.mrb[0].mxu0
  %570 = vmatprep.mubr.f32.mxu0 0.0
  %571 = vmatmul.mubr.f32.gmra.mrb[0].mxu0 %v317
  %v572 = vpop.f32.mrb[0].mxu0
  %v573 = vadd.f32 0.0, %v572
  %v574 = vpop.f32.mrb[0].mxu0
  %575 = vdwg.mxu0
  %v576 = vadd.f32 %v399, %v498
  %v577 = vadd.f32 %v400, %v503
  %v578 = vadd.f32 %v401, %v508
  %v579 = vadd.f32 %v402, %v513
  %v580 = vadd.f32 %v403, %v518
  %v581 = vadd.f32 %v404, %v523
  %v582 = vadd.f32 %v405, %v528
  %v583 = vadd.f32 %v406, %v533
  %v584 = vadd.f32 %v407, %v538
  %v585 = vadd.f32 %v408, %v543
  %v586 = vadd.f32 %v409, %v548
  %v587 = vadd.f32 %v410, %v553
  %v588 = vadd.f32 %v411, %v558
  %v589 = vadd.f32 %v412, %v563
  %v590 = vadd.f32 %v413, %v568
  %v591 = vadd.f32 %v414, %v573
  %vm592 = vcmask 31744
  %593 = vst.msk [vmem:[#allocation2] sm:$0xff] %vm592, %v576
  %594 = vst.msk [vmem:[#allocation2 + $0x8] sm:$0xff] %vm592, %v577
  %595 = vst.msk [vmem:[#allocation2 + $0x10] sm:$0xff] %vm592, %v578
  %596 = vst.msk [vmem:[#allocation2 + $0x18] sm:$0xff] %vm592, %v579
  %597 = vst.msk [vmem:[#allocation2 + $0x20] sm:$0xff] %vm592, %v580
  %598 = vst.msk [vmem:[#allocation2 + $0x28] sm:$0xff] %vm592, %v581
  %599 = vst.msk [vmem:[#allocation2 + $0x30] sm:$0xff] %vm592, %v582
  %600 = vst.msk [vmem:[#allocation2 + $0x38] sm:$0xff] %vm592, %v583
  %601 = vst.msk [vmem:[#allocation2 + $0x40] sm:$0xff] %vm592, %v584
  %602 = vst.msk [vmem:[#allocation2 + $0x48] sm:$0xff] %vm592, %v585
  %603 = vst.msk [vmem:[#allocation2 + $0x50] sm:$0xff] %vm592, %v586
  %604 = vst.msk [vmem:[#allocation2 + $0x58] sm:$0xff] %vm592, %v587
  %605 = vst.msk [vmem:[#allocation2 + $0x60] sm:$0xff] %vm592, %v588
  %606 = vst.msk [vmem:[#allocation2 + $0x68] sm:$0xff] %vm592, %v589
  %607 = vst.msk [vmem:[#allocation2 + $0x70] sm:$0xff] %vm592, %v590
  %608 = vst.msk [vmem:[#allocation2 + $0x78] sm:$0xff] %vm592, %v591
  // Predicated region
  $region22: #{_spgat_forward.3} parent=0 // pred_check
    %p609 = pneg %p17
  $region23: #{_spgat_forward.3} parent=0 // pred_check_branch
    %611 = sbr.rel (%p609) target = $region25
  $region24: #{_spgat_forward.3} parent=0 // pred_region
    %v612 = vld [vmem:[#allocation3] sm:$0xff]
    %v613 = vld [vmem:[#allocation3 + $0x8] sm:$0xff]
    %v614 = vld [vmem:[#allocation3 + $0x10] sm:$0xff]
    %v615 = vld [vmem:[#allocation3 + $0x18] sm:$0xff]
    %v616 = vld [vmem:[#allocation3 + $0x20] sm:$0xff]
    %v617 = vld [vmem:[#allocation3 + $0x28] sm:$0xff]
    %v618 = vld [vmem:[#allocation3 + $0x30] sm:$0xff]
    %v619 = vld [vmem:[#allocation3 + $0x38] sm:$0xff]
    %v620 = vld [vmem:[#allocation3 + $0x40] sm:$0xff]
    %v621 = vld [vmem:[#allocation3 + $0x48] sm:$0xff]
    %v622 = vld [vmem:[#allocation3 + $0x50] sm:$0xff]
    %v623 = vld [vmem:[#allocation3 + $0x58] sm:$0xff]
    %v624 = vld [vmem:[#allocation3 + $0x60] sm:$0xff]
    %v625 = vld [vmem:[#allocation3 + $0x68] sm:$0xff]
    %v626 = vld [vmem:[#allocation3 + $0x70] sm:$0xff]
    %v627 = vld [vmem:[#allocation3 + $0x78] sm:$0xff]
    %v628 = vrcp.pop %v612
    %v629 = vrcp.pop %v613
    %v630 = vrcp.pop %v614
    %v631 = vrcp.pop %v615
    %v632 = vrcp.pop %v616
    %v633 = vrcp.pop %v617
    %v634 = vrcp.pop %v618
    %v635 = vrcp.pop %v619
    %v636 = vrcp.pop %v620
    %v637 = vrcp.pop %v621
    %v638 = vrcp.pop %v622
    %v639 = vrcp.pop %v623
    %v640 = vrcp.pop %v624
    %v641 = vrcp.pop %v625
    %v642 = vrcp.pop %v626
    %v643 = vrcp.pop %v627
    %v644 = vld [vmem:[#allocation2] sm:$0xff]
    %v645 = vld [vmem:[#allocation2 + $0x8] sm:$0xff]
    %v646 = vld [vmem:[#allocation2 + $0x10] sm:$0xff]
    %v647 = vld [vmem:[#allocation2 + $0x18] sm:$0xff]
    %v648 = vld [vmem:[#allocation2 + $0x20] sm:$0xff]
    %v649 = vld [vmem:[#allocation2 + $0x28] sm:$0xff]
    %v650 = vld [vmem:[#allocation2 + $0x30] sm:$0xff]
    %v651 = vld [vmem:[#allocation2 + $0x38] sm:$0xff]
    %v652 = vld [vmem:[#allocation2 + $0x40] sm:$0xff]
    %v653 = vld [vmem:[#allocation2 + $0x48] sm:$0xff]
    %v654 = vld [vmem:[#allocation2 + $0x50] sm:$0xff]
    %v655 = vld [vmem:[#allocation2 + $0x58] sm:$0xff]
    %v656 = vld [vmem:[#allocation2 + $0x60] sm:$0xff]
    %v657 = vld [vmem:[#allocation2 + $0x68] sm:$0xff]
    %v658 = vld [vmem:[#allocation2 + $0x70] sm:$0xff]
    %v659 = vld [vmem:[#allocation2 + $0x78] sm:$0xff]
    %661 = vset.pattern.permute.xlu0 0
    %662 = vperm.xlu0 %661, %v628
    %v663 = vpop.permute.xlu0 %662
    %666 = vset.pattern.permute.xlu0 0
    %667 = vperm.xlu0 %666, %v629
    %v668 = vpop.permute.xlu0 %667
    %671 = vset.pattern.permute.xlu0 0
    %672 = vperm.xlu0 %671, %v630
    %v673 = vpop.permute.xlu0 %672
    %676 = vset.pattern.permute.xlu0 0
    %677 = vperm.xlu0 %676, %v631
    %v678 = vpop.permute.xlu0 %677
    %681 = vset.pattern.permute.xlu0 0
    %682 = vperm.xlu0 %681, %v632
    %v683 = vpop.permute.xlu0 %682
    %686 = vset.pattern.permute.xlu0 0
    %687 = vperm.xlu0 %686, %v633
    %v688 = vpop.permute.xlu0 %687
    %691 = vset.pattern.permute.xlu0 0
    %692 = vperm.xlu0 %691, %v634
    %v693 = vpop.permute.xlu0 %692
    %696 = vset.pattern.permute.xlu0 0
    %697 = vperm.xlu0 %696, %v635
    %v698 = vpop.permute.xlu0 %697
    %701 = vset.pattern.permute.xlu0 0
    %702 = vperm.xlu0 %701, %v636
    %v703 = vpop.permute.xlu0 %702
    %706 = vset.pattern.permute.xlu0 0
    %707 = vperm.xlu0 %706, %v637
    %v708 = vpop.permute.xlu0 %707
    %711 = vset.pattern.permute.xlu0 0
    %712 = vperm.xlu0 %711, %v638
    %v713 = vpop.permute.xlu0 %712
    %716 = vset.pattern.permute.xlu0 0
    %717 = vperm.xlu0 %716, %v639
    %v718 = vpop.permute.xlu0 %717
    %721 = vset.pattern.permute.xlu0 0
    %722 = vperm.xlu0 %721, %v640
    %v723 = vpop.permute.xlu0 %722
    %726 = vset.pattern.permute.xlu0 0
    %727 = vperm.xlu0 %726, %v641
    %v728 = vpop.permute.xlu0 %727
    %731 = vset.pattern.permute.xlu0 0
    %732 = vperm.xlu0 %731, %v642
    %v733 = vpop.permute.xlu0 %732
    %736 = vset.pattern.permute.xlu0 0
    %737 = vperm.xlu0 %736, %v643
    %v738 = vpop.permute.xlu0 %737
    %v740 = vmul.f32 %v644, %v663
    %v741 = vmul.f32 %v645, %v668
    %v742 = vmul.f32 %v646, %v673
    %v743 = vmul.f32 %v647, %v678
    %v744 = vmul.f32 %v648, %v683
    %v745 = vmul.f32 %v649, %v688
    %v746 = vmul.f32 %v650, %v693
    %v747 = vmul.f32 %v651, %v698
    %v748 = vmul.f32 %v652, %v703
    %v749 = vmul.f32 %v653, %v708
    %v750 = vmul.f32 %v654, %v713
    %v751 = vmul.f32 %v655, %v718
    %v752 = vmul.f32 %v656, %v723
    %v753 = vmul.f32 %v657, %v728
    %v754 = vmul.f32 %v658, %v733
    %v755 = vmul.f32 %v659, %v738
    %vm756 = vcmp.gt.f32.partialorder %v740, 0.0
    %vm757 = vcmp.gt.f32.partialorder %v741, 0.0
    %vm758 = vcmp.gt.f32.partialorder %v742, 0.0
    %vm759 = vcmp.gt.f32.partialorder %v743, 0.0
    %vm760 = vcmp.gt.f32.partialorder %v744, 0.0
    %vm761 = vcmp.gt.f32.partialorder %v745, 0.0
    %vm762 = vcmp.gt.f32.partialorder %v746, 0.0
    %vm763 = vcmp.gt.f32.partialorder %v747, 0.0
    %vm764 = vcmp.gt.f32.partialorder %v748, 0.0
    %vm765 = vcmp.gt.f32.partialorder %v749, 0.0
    %vm766 = vcmp.gt.f32.partialorder %v750, 0.0
    %vm767 = vcmp.gt.f32.partialorder %v751, 0.0
    %vm768 = vcmp.gt.f32.partialorder %v752, 0.0
    %vm769 = vcmp.gt.f32.partialorder %v753, 0.0
    %vm770 = vcmp.gt.f32.partialorder %v754, 0.0
    %vm771 = vcmp.gt.f32.partialorder %v755, 0.0
    %v772 = vmul.f32 %v740, 1.442695
    %v773 = vpow.pop %v772
    %v774 = vmul.f32 %v741, 1.442695
    %v775 = vpow.pop %v774
    %v776 = vmul.f32 %v742, 1.442695
    %v777 = vpow.pop %v776
    %v778 = vmul.f32 %v743, 1.442695
    %v779 = vpow.pop %v778
    %v780 = vmul.f32 %v744, 1.442695
    %v781 = vpow.pop %v780
    %v782 = vmul.f32 %v745, 1.442695
    %v783 = vpow.pop %v782
    %v784 = vmul.f32 %v746, 1.442695
    %v785 = vpow.pop %v784
    %v786 = vmul.f32 %v747, 1.442695
    %v787 = vpow.pop %v786
    %v788 = vmul.f32 %v748, 1.442695
    %v789 = vpow.pop %v788
    %v790 = vmul.f32 %v749, 1.442695
    %v791 = vpow.pop %v790
    %v792 = vmul.f32 %v750, 1.442695
    %v793 = vpow.pop %v792
    %v794 = vmul.f32 %v751, 1.442695
    %v795 = vpow.pop %v794
    %v796 = vmul.f32 %v752, 1.442695
    %v797 = vpow.pop %v796
    %v798 = vmul.f32 %v753, 1.442695
    %v799 = vpow.pop %v798
    %v800 = vmul.f32 %v754, 1.442695
    %v801 = vpow.pop %v800
    %v802 = vmul.f32 %v755, 1.442695
    %v803 = vpow.pop %v802
    %v804 = vsub.f32 %v773, 1.0
    %v805 = vsub.f32 %v775, 1.0
    %v806 = vsub.f32 %v777, 1.0
    %v807 = vsub.f32 %v779, 1.0
    %v808 = vsub.f32 %v781, 1.0
    %v809 = vsub.f32 %v783, 1.0
    %v810 = vsub.f32 %v785, 1.0
    %v811 = vsub.f32 %v787, 1.0
    %v812 = vsub.f32 %v789, 1.0
    %v813 = vsub.f32 %v791, 1.0
    %v814 = vsub.f32 %v793, 1.0
    %v815 = vsub.f32 %v795, 1.0
    %v816 = vsub.f32 %v797, 1.0
    %v817 = vsub.f32 %v799, 1.0
    %v818 = vsub.f32 %v801, 1.0
    %v819 = vsub.f32 %v803, 1.0
    %v820 = vsel %vm756, %v740, %v804
    %v821 = vsel %vm757, %v741, %v805
    %v822 = vsel %vm758, %v742, %v806
    %v823 = vsel %vm759, %v743, %v807
    %v824 = vsel %vm760, %v744, %v808
    %v825 = vsel %vm761, %v745, %v809
    %v826 = vsel %vm762, %v746, %v810
    %v827 = vsel %vm763, %v747, %v811
    %v828 = vsel %vm764, %v748, %v812
    %v829 = vsel %vm765, %v749, %v813
    %v830 = vsel %vm766, %v750, %v814
    %v831 = vsel %vm767, %v751, %v815
    %v832 = vsel %vm768, %v752, %v816
    %v833 = vsel %vm769, %v753, %v817
    %v834 = vsel %vm770, %v754, %v818
    %v835 = vsel %vm771, %v755, %v819
    %v836 = vtanh.pop %v820
    %v837 = vtanh.pop %v821
    %v838 = vtanh.pop %v822
    %v839 = vtanh.pop %v823
    %v840 = vtanh.pop %v824
    %v841 = vtanh.pop %v825
    %v842 = vtanh.pop %v826
    %v843 = vtanh.pop %v827
    %v844 = vtanh.pop %v828
    %v845 = vtanh.pop %v829
    %v846 = vtanh.pop %v830
    %v847 = vtanh.pop %v831
    %v848 = vtanh.pop %v832
    %v849 = vtanh.pop %v833
    %v850 = vtanh.pop %v834
    %v851 = vtanh.pop %v835
    %852 = vst.msk [vmem:[%s4] sm:$0xff] %vm592, %v836
    %853 = vst.msk [vmem:[%s4 + $0x8] sm:$0xff] %vm592, %v837
    %854 = vst.msk [vmem:[%s4 + $0x10] sm:$0xff] %vm592, %v838
    %855 = vst.msk [vmem:[%s4 + $0x18] sm:$0xff] %vm592, %v839
    %856 = vst.msk [vmem:[%s4 + $0x20] sm:$0xff] %vm592, %v840
    %857 = vst.msk [vmem:[%s4 + $0x28] sm:$0xff] %vm592, %v841
    %858 = vst.msk [vmem:[%s4 + $0x30] sm:$0xff] %vm592, %v842
    %859 = vst.msk [vmem:[%s4 + $0x38] sm:$0xff] %vm592, %v843
    %860 = vst.msk [vmem:[%s4 + $0x40] sm:$0xff] %vm592, %v844
    %861 = vst.msk [vmem:[%s4 + $0x48] sm:$0xff] %vm592, %v845
    %862 = vst.msk [vmem:[%s4 + $0x50] sm:$0xff] %vm592, %v846
    %863 = vst.msk [vmem:[%s4 + $0x58] sm:$0xff] %vm592, %v847
    %864 = vst.msk [vmem:[%s4 + $0x60] sm:$0xff] %vm592, %v848
    %865 = vst.msk [vmem:[%s4 + $0x68] sm:$0xff] %vm592, %v849
    %866 = vst.msk [vmem:[%s4 + $0x70] sm:$0xff] %vm592, %v850
    %867 = vst.msk [vmem:[%s4 + $0x78] sm:$0xff] %vm592, %v851
  $region25: #{_spgat_forward.3} parent=0 // pred_fallthru
    _
  // Predicated region
  $region26: #{_spgat_forward.3} parent=0 // pred_check
    _
  $region27: #{_spgat_forward.3} parent=0 // pred_check_branch
    %869 = sbr.rel (0) target = $region29
  $region28: #{_spgat_forward.3} parent=0 // pred_region
    _
  $region29: #{_spgat_forward.3} parent=0 // pred_fallthru
    _
  // Predicated region
  $region30: #{_spgat_forward.3} parent=0 // pred_check
    _
  $region31: #{_spgat_forward.3} parent=0 // pred_check_branch
    %871 = sbr.rel (0) target = $region33
  $region32: #{_spgat_forward.3} parent=0 // pred_region
    _
  $region33: #{_spgat_forward.3} parent=0 // pred_fallthru
    _

</llo_original>
